<compile_context>
chip_gen: v7x
topology: tpu7x:2x2x1
jax: 0.10.0
libtpu: 0.0.40
codegen_flags: <defaults>
</compile_context>

<pallas_src>
import jax
import jax.numpy as jnp
from jax import lax
from jax.experimental import pallas as pl
from jax.experimental.pallas import tpu as pltpu

EPS = 1e-5  # BatchNorm2d default eps


# --------------------------------------------------------------------------------------
# Kernels
# --------------------------------------------------------------------------------------
def _conv1_kernel(x_ref, m_ref, a0_ref, a1_ref, a2_ref, o_ref, s_ref):
    """Reflection-padded 3x3 conv as three banded MXU matmuls over a flat row block.

    x_ref : (RB, W*Cin)     bf16  NB images, each R1p rows = [reflect, data(H), reflect, 0]
    m_ref : (RB, 1)         f32   1.0 on valid conv-output rows (row % R1p < H) else 0.0
    a*    : (W*Cin, W*Cmid) bf16  banded weights per vertical tap (W reflection folded in)
    o_ref : (RB, W*Cmid)    bf16  conv output rows; invalid rows forced to 0 (convT halo)
    s_ref : (1, 2, W*Cmid)  f32   per-lane [sum, sum of squares] over the valid rows
    """
    RB = x_ref.shape[0]
    M = RB - 2                                      # even (RB is a multiple of 8)
    xf = x_ref[...].astype(jnp.float32)             # one up-cast; f32 value slices are cheap
    x0 = xf[0:M, :].astype(jnp.bfloat16)            # tap  i
    x1 = xf[1:M + 1, :].astype(jnp.bfloat16)        # tap  i+1
    x2 = xf[2:M + 2, :].astype(jnp.bfloat16)        # tap  i+2
    acc = jnp.dot(x0, a0_ref[...], preferred_element_type=jnp.float32)
    acc += jnp.dot(x1, a1_ref[...], preferred_element_type=jnp.float32)
    acc += jnp.dot(x2, a2_ref[...], preferred_element_type=jnp.float32)
    acc = acc * m_ref[0:M, :]                       # zero pad / cross-image rows
    o_ref[0:M, :] = acc.astype(o_ref.dtype)         # even row count -> packed-aligned store
    o_ref[M:RB, :] = jnp.zeros((2, o_ref.shape[1]), o_ref.dtype)
    s_ref[0, 0:1, :] = jnp.sum(acc, axis=0, keepdims=True)
    s_ref[0, 1:2, :] = jnp.sum(acc * acc, axis=0, keepdims=True)


def _convT_kernel(h_ref, m_ref, pk_ref, be_ref, bo0_ref, bo1_ref, oe_ref, oo_ref, s_ref):
    """Fused BN1(scale/shift)+PReLU on load, then polyphase stride-2 ConvTranspose2d.

    h_ref  : (RB, W*Cmid)       bf16  conv1 rows (invalid rows are exactly 0)
    m_ref  : (RB, 1)            f32   valid-row mask (shared with pass 1)
    pk_ref : (3, W*Cmid)        f32   packed [BN1 scale, BN1 shift, PReLU slope] per lane
    b*     : (W*Cmid, 2W*Cout)  bf16  polyphase banded weights (column phases interleaved)
    oe_ref : (RB, 2W*Cout)      bf16  even output rows: row 2i  <- h[i]
    oo_ref : (RB, 2W*Cout)      bf16  odd  output rows: row 2i+1 <- h[i], h[i+1]
    s_ref  : (1, 2, 2W*Cout)    f32   per-lane [sum, sum of squares] over valid rows
    """
    RB = h_ref.shape[0]
    sc = pk_ref[0:1, :]
    sh = pk_ref[1:2, :]
    al = pk_ref[2:3, :]
    g = h_ref[...].astype(jnp.float32) * sc + sh
    g = jnp.where(g >= 0.0, g, al * g)
    g = g * m_ref[...]                              # pad rows must stay 0 after the BN shift
    ge = g.astype(jnp.bfloat16)                     # (RB,   K) even-phase operand
    g0 = g[0:RB - 1, :].astype(jnp.bfloat16)        # (RB-1, K) odd-phase tap h[i]
    g1 = g[1:RB, :].astype(jnp.bfloat16)            # (RB-1, K) odd-phase tap h[i+1]
    ye = jnp.dot(ge, be_ref[...], preferred_element_type=jnp.float32)        # (RB,   L)
    yo = (jnp.dot(g0, bo0_ref[...], preferred_element_type=jnp.float32)
          + jnp.dot(g1, bo1_ref[...], preferred_element_type=jnp.float32))   # (RB-1, L)
    yo = yo * m_ref[0:RB - 1, :]                    # kill rows whose h[i+1] crossed images
    oe_ref[...] = ye.astype(oe_ref.dtype)
    # Last two (always invalid, never read) rows stay unwritten -> aligned packed store.
    oo_ref[0:RB - 2, :] = yo[0:RB - 2, :].astype(oo_ref.dtype)
    s_ref[0, 0:1, :] = (jnp.sum(ye, axis=0, keepdims=True)
                        + jnp.sum(yo, axis=0, keepdims=True))
    s_ref[0, 1:2, :] = (jnp.sum(ye * ye, axis=0, keepdims=True)
                        + jnp.sum(yo * yo, axis=0, keepdims=True))


# --------------------------------------------------------------------------------------
# Wrapper-side weight preparation (traced once; all tiny)
# --------------------------------------------------------------------------------------
def _conv1_band_weights(w1, W):
    """w1: (3,3,Cin,Cmid) HWIO correlation kernel.  Returns per-vertical-tap banded matrices
    A_kh of shape (W*Cin, W*Cmid) with the ReflectionPad2d(1) column reflection folded in, so
    that conv_out_row[i] = sum_kh x_pad_row[i+kh] @ A_kh."""
    Cin = w1.shape[2]
    f32 = jnp.float32
    refl = jnp.eye(W, W + 2, k=1, dtype=f32).at[1, 0].set(1.0).at[W - 2, W + 1].set(1.0)
    refl = jnp.kron(refl, jnp.eye(Cin, dtype=f32))                    # (W*Cin, (W+2)*Cin)
    mats = []
    for kh in range(3):
        band = sum(jnp.kron(jnp.eye(W + 2, W, k=-kw, dtype=f32), w1[kh, kw])
                   for kw in range(3))                                # ((W+2)*Cin, W*Cmid)
        mats.append((refl @ band).astype(jnp.bfloat16))
    return mats


def _convT_band_weights(wf, W):
    """wf: (3,3,Cmid,Cout), the ConvTranspose2d kernel spatially flipped into HWIO
    correlation form on the stride-2 zero-inserted input.  Returns polyphase banded matrices
    (W*Cmid, 2W*Cout): even rows <- h[i] @ be;  odd rows <- h[i] @ bo0 + h[i+1] @ bo1."""
    f32 = jnp.float32

    def sel(b, d):                       # (W, 2W): input col j+d -> output col 2j+b
        j = jnp.arange(W - d)
        return jnp.zeros((W, 2 * W), f32).at[j + d, 2 * j + b].set(1.0)

    def band(w_b0, w_b1_d0, w_b1_d1):
        return (jnp.kron(sel(0, 0), w_b0) + jnp.kron(sel(1, 0), w_b1_d0)
                + jnp.kron(sel(1, 1), w_b1_d1)).astype(jnp.bfloat16)

    be = band(wf[1, 1], wf[1, 0], wf[1, 2])     # even output rows
    bo0 = band(wf[0, 1], wf[0, 0], wf[0, 2])    # odd rows, from h[i]
    bo1 = band(wf[2, 1], wf[2, 0], wf[2, 2])    # odd rows, from h[i+1]
    return be, bo0, bo1


def _bn_affine(stats, C, count, gamma, beta, reps):
    """Fold per-step (sum, sumsq) lane partials into global per-channel BN scale/shift,
    tiled to the lane layout.  Training-mode (biased) batch statistics."""
    s = jnp.sum(stats[:, 0, :], axis=0).reshape(-1, C).sum(axis=0)
    ss = jnp.sum(stats[:, 1, :], axis=0).reshape(-1, C).sum(axis=0)
    mean = s / count
    var = ss / count - mean * mean
    scale = gamma * lax.rsqrt(var + EPS)
    shift = beta - mean * scale
    return (jnp.tile(scale, reps).reshape(1, reps * C),
            jnp.tile(shift, reps).reshape(1, reps * C))


# --------------------------------------------------------------------------------------
# pallas_call wrappers
# --------------------------------------------------------------------------------------
def _full_spec(shape):
    zeros = (0,) * len(shape)
    return pl.BlockSpec(shape, lambda n: zeros)


_PARAMS = pltpu.CompilerParams(
    dimension_semantics=("parallel",),
    vmem_limit_bytes=32 * 1024 * 1024,   # explicit budget; weights/blocks here are a few KiB
)


def _conv1_pass(x2d, mask, a0, a1, a2, rb, grid_n):
    rows, wcin = x2d.shape
    wcmid = a0.shape[1]
    return pl.pallas_call(
        _conv1_kernel,
        grid=(grid_n,),
        in_specs=[pl.BlockSpec((rb, wcin), lambda n: (n, 0)),
                  _full_spec(mask.shape),
                  _full_spec(a0.shape), _full_spec(a1.shape), _full_spec(a2.shape)],
        out_specs=(pl.BlockSpec((rb, wcmid), lambda n: (n, 0)),
                   pl.BlockSpec((1, 2, wcmid), lambda n: (n, 0, 0))),
        out_shape=(jax.ShapeDtypeStruct((rows, wcmid), jnp.bfloat16),
                   jax.ShapeDtypeStruct((grid_n, 2, wcmid), jnp.float32)),
        compiler_params=_PARAMS,
    )(x2d, mask, a0, a1, a2)


def _convT_pass(h2d, mask, pk, be, bo0, bo1, rb, grid_n):
    rows, wcmid = h2d.shape
    L = be.shape[1]
    return pl.pallas_call(
        _convT_kernel,
        grid=(grid_n,),
        in_specs=[pl.BlockSpec((rb, wcmid), lambda n: (n, 0)),
                  _full_spec(mask.shape), _full_spec(pk.shape),
                  _full_spec(be.shape), _full_spec(bo0.shape), _full_spec(bo1.shape)],
        out_specs=(pl.BlockSpec((rb, L), lambda n: (n, 0)),
                   pl.BlockSpec((rb, L), lambda n: (n, 0)),
                   pl.BlockSpec((1, 2, L), lambda n: (n, 0, 0))),
        out_shape=(jax.ShapeDtypeStruct((rows, L), jnp.bfloat16),
                   jax.ShapeDtypeStruct((rows, L), jnp.bfloat16),
                   jax.ShapeDtypeStruct((grid_n, 2, L), jnp.float32)),
        compiler_params=_PARAMS,
    )(h2d, mask, pk, be, bo0, bo1)


def decoder_up_block(x_nchw, p, rows_per_step=256):
    """Forward pass of _DecoderUpBlock.  Input NCHW, output NCHW.  Requires H >= 2, W >= 3."""
    N, Cin, H, W = x_nchw.shape
    Cmid = p["w1"].shape[-1]
    Cout = p["w2"].shape[-1]

    # Per-image padded row count (reflect pad + zero tail, rounded to a sublane multiple so
    # batch-packed blocks stay (8,128)-aligned for any NB).  NB images share one grid step.
    R1p = -(-(H + 2) // 8) * 8
    NB = max(1, min(N, max(1, rows_per_step // R1p)))
    while N % NB:
        NB -= 1
    G = N // NB
    RB = NB * R1p

    # Layout glue (XLA): NCHW -> lane-flattened NHWC (bf16), reflect-pad H, flatten rows.
    x = jnp.transpose(x_nchw, (0, 2, 3, 1)).reshape(N, H, W * Cin).astype(jnp.bfloat16)
    x = jnp.pad(x, ((0, 0), (1, 1), (0, 0)), mode="reflect")
    x = jnp.pad(x, ((0, 0), (0, R1p - (H + 2)), (0, 0)))
    x2d = x.reshape(N * R1p, W * Cin)

    # Valid conv-output-row mask (identical for every grid step -> constant index_map).
    mask = (jnp.arange(RB) % R1p < H).astype(jnp.float32).reshape(RB, 1)

    a0, a1, a2 = _conv1_band_weights(p["w1"], W)
    be, bo0, bo1 = _convT_band_weights(p["w2"], W)
    alpha = p["alpha"].reshape(())

    # pass 1: reflection-padded 3x3 conv + per-lane batch-stat partials
    h_raw, st1 = _conv1_pass(x2d, mask, a0, a1, a2, RB, G)
    sc1, sh1 = _bn_affine(st1, Cmid, N * H * W, p["g1"], p["bt1"], W)
    pk1 = jnp.stack([sc1.reshape(-1), sh1.reshape(-1),
                     jnp.broadcast_to(alpha, (W * Cmid,))], axis=0).astype(jnp.float32)

    # pass 2: BN1+PReLU fused on load, polyphase ConvTranspose2d + stat partials
    ye_raw, yo_raw, st2 = _convT_pass(h_raw, mask, pk1, be, bo0, bo1, RB, G)
    sc2, sh2 = _bn_affine(st2, Cout, N * (2 * H) * (2 * W), p["g2"], p["bt2"], 2 * W)

    # BN2 + PReLU + layout epilogue in plain jnp: XLA fuses it with the slice/transpose.
    def finish(z):
        z = z.astype(jnp.float32) * sc2 + sh2
        z = jnp.where(z >= 0.0, z, alpha * z)
        return z.reshape(N, R1p, 2 * W, Cout)[:, :H]          # drop pad/garbage rows

    ye = finish(ye_raw)                                        # output rows 2i
    yo = finish(yo_raw)                                        # output rows 2i+1
    y = jnp.stack([ye, yo], axis=2)                            # (N, H, 2, 2W, Cout)
    return jnp.transpose(y, (0, 4, 1, 2, 3)).reshape(N, Cout, 2 * H, 2 * W)


# --------------------------------------------------------------------------------------
# Pure-JAX reference (the PyTorch spec), with selectable conv-operand dtype
# --------------------------------------------------------------------------------------
def _bn_prelu_ref(v, gamma, beta, alpha):
    mean = jnp.mean(v, axis=(0, 1, 2), keepdims=True)
    var = jnp.mean((v - mean) ** 2, axis=(0, 1, 2), keepdims=True)
    v = (v - mean) * lax.rsqrt(var + EPS)
    v = v * gamma.reshape(1, 1, 1, -1) + beta.reshape(1, 1, 1, -1)
    return jnp.where(v >= 0, v, alpha * v)


def decoder_up_block_ref(x_nchw, p, conv_dtype=jnp.float32):
    dn = ("NHWC", "HWIO", "NHWC")
    x = jnp.transpose(x_nchw, (0, 2, 3, 1))
    x_pad = jnp.pad(x, ((0, 0), (1, 1), (1, 1), (0, 0)), mode="reflect")
    h = lax.conv_general_dilated(
        x_pad.astype(conv_dtype), p["w1"].astype(conv_dtype), (1, 1), "VALID",
        dimension_numbers=dn, preferred_element_type=jnp.float32,
        precision=lax.Precision.HIGHEST)
    h = _bn_prelu_ref(h, p["g1"], p["bt1"], p["alpha"])
    y = lax.conv_general_dilated(
        h.astype(conv_dtype), p["w2"].astype(conv_dtype), (1, 1), ((1, 2), (1, 2)),
        lhs_dilation=(2, 2), dimension_numbers=dn, preferred_element_type=jnp.float32,
        precision=lax.Precision.HIGHEST)
    y = _bn_prelu_ref(y + p["b2"].reshape(1, 1, 1, -1), p["g2"], p["bt2"], p["alpha"])
    return jnp.transpose(y, (0, 3, 1, 2))


# --------------------------------------------------------------------------------------
if __name__ == "__main__":
    key = jax.random.PRNGKey(0)
    k_x, k_w1, k_w2, k_b2 = jax.random.split(key, 4)

    N, IN_NC, H, W = 2, 4, 16, 16
    MID_NC, OUT_NC = 8, 4

    x = jax.random.normal(k_x, (N, IN_NC, H, W), jnp.float32)

    # PyTorch parameter shapes:
    #   Conv2d(in, mid, 3, bias=False)   weight (mid, in, 3, 3)
    #   ConvTranspose2d(mid, out, 3)     weight (mid, out, 3, 3), bias (out,)
    #   BatchNorm2d defaults             gamma=1, beta=0 (training-mode batch stats)
    #   nn.PReLU() default               one shared slope 0.25 (same module used twice)
    w1_pt = 0.2 * jax.random.normal(k_w1, (MID_NC, IN_NC, 3, 3), jnp.float32)
    w2_pt = 0.2 * jax.random.normal(k_w2, (MID_NC, OUT_NC, 3, 3), jnp.float32)
    b2 = 0.1 * jax.random.normal(k_b2, (OUT_NC,), jnp.float32)

    params = {
        "w1": jnp.transpose(w1_pt, (2, 3, 1, 0)),                      # OIHW -> HWIO
        "g1": jnp.ones((MID_NC,), jnp.float32),
        "bt1": jnp.zeros((MID_NC,), jnp.float32),
        # ConvTranspose2d weight (in,out,kh,kw) -> spatially flipped HWIO correlation kernel
        "w2": jnp.transpose(jnp.flip(w2_pt, axis=(2, 3)), (2, 3, 0, 1)),
        "b2": b2,                     # reference only: exactly absorbed by the following BN
        "g2": jnp.ones((OUT_NC,), jnp.float32),
        "bt2": jnp.zeros((OUT_NC,), jnp.float32),
        "alpha": jnp.full((1,), 0.25, jnp.float32),
    }

    out = jax.jit(decoder_up_block)(x, params)
    out = jax.block_until_ready(out)
    assert out.shape == (N, OUT_NC, 2 * H, 2 * W), out.shape

    # Check against the reference with the same bf16 matmul-operand policy (slightly loosened
    # because h / y intermediates are now stored in bf16), plus a looser full-f32 check.
    ref16 = decoder_up_block_ref(x, params, jnp.bfloat16)
    ref32 = decoder_up_block_ref(x, params, jnp.float32)
    assert bool(jnp.allclose(out, ref16, rtol=2e-2, atol=2e-2)), \
        float(jnp.max(jnp.abs(out - ref16)))
    assert bool(jnp.allclose(out, ref32, rtol=6e-2, atol=6e-2)), \
        float(jnp.max(jnp.abs(out - ref32)))
    print("KERNEL_OK")
</pallas_src>

<mosaic_0001>
module attributes {stable_mosaic.version = 11 : i64} {
  func.func @_conv1_kernel(%arg0: i32, %arg1: memref<48x64xbf16, #tpu.memory_space<vmem>>, %arg2: memref<48x1xf32, #tpu.memory_space<vmem>>, %arg3: memref<64x128xbf16, #tpu.memory_space<vmem>>, %arg4: memref<64x128xbf16, #tpu.memory_space<vmem>>, %arg5: memref<64x128xbf16, #tpu.memory_space<vmem>>, %arg6: memref<48x128xbf16, #tpu.memory_space<vmem>>, %arg7: memref<1x2x128xf32, #tpu.memory_space<vmem>>) attributes {dimension_semantics = [#tpu.dimension_semantics<parallel>], iteration_bounds = array<i64: 1>, scalar_prefetch = 0 : i64, scratch_operands = 0 : i64, tpu.core_type = #tpu.core_type<tc>, window_params = [{transform_indices = @transform_0, window_bounds = array<i64: 48, 64>}, {pipeline_mode = #tpu.pipeline_mode<synchronous>, transform_indices = @transform_1, window_bounds = array<i64: 48, 1>}, {pipeline_mode = #tpu.pipeline_mode<synchronous>, transform_indices = @transform_2, window_bounds = array<i64: 64, 128>}, {pipeline_mode = #tpu.pipeline_mode<synchronous>, transform_indices = @transform_3, window_bounds = array<i64: 64, 128>}, {pipeline_mode = #tpu.pipeline_mode<synchronous>, transform_indices = @transform_4, window_bounds = array<i64: 64, 128>}, {transform_indices = @transform_5, window_bounds = array<i64: 48, 128>}, {transform_indices = @transform_6, window_bounds = array<i64: 1, 2, 128>}]} {
    %c0 = arith.constant 0 : index
    %c0_0 = arith.constant 0 : index
    %0 = vector.load %arg1[%c0, %c0_0] : memref<48x64xbf16, #tpu.memory_space<vmem>>, vector<48x64xbf16>
    %1 = arith.extf %0 : vector<48x64xbf16> to vector<48x64xf32>
    %2 = vector.extract_strided_slice %1 {offsets = [0, 0], sizes = [46, 64], strides = [1, 1]} : vector<48x64xf32> to vector<46x64xf32>
    %3 = arith.truncf %2 : vector<46x64xf32> to vector<46x64xbf16>
    %4 = vector.extract_strided_slice %1 {offsets = [1, 0], sizes = [46, 64], strides = [1, 1]} : vector<48x64xf32> to vector<46x64xf32>
    %5 = arith.truncf %4 : vector<46x64xf32> to vector<46x64xbf16>
    %6 = vector.extract_strided_slice %1 {offsets = [2, 0], sizes = [46, 64], strides = [1, 1]} : vector<48x64xf32> to vector<46x64xf32>
    %7 = arith.truncf %6 : vector<46x64xf32> to vector<46x64xbf16>
    %c0_1 = arith.constant 0 : index
    %c0_2 = arith.constant 0 : index
    %8 = vector.load %arg3[%c0_1, %c0_2] : memref<64x128xbf16, #tpu.memory_space<vmem>>, vector<64x128xbf16>
    %cst = arith.constant dense<0.000000e+00> : vector<46x128xf32>
    %9 = tpu.matmul %3, %8, %cst {dimension_numbers = #tpu.dot_dimension_numbers<[1], [0], [0], [1], [0, 0, 1, 1], [], []>} : vector<46x64xbf16>, vector<64x128xbf16>, vector<46x128xf32> -> vector<46x128xf32>
    %c0_3 = arith.constant 0 : index
    %c0_4 = arith.constant 0 : index
    %10 = vector.load %arg4[%c0_3, %c0_4] : memref<64x128xbf16, #tpu.memory_space<vmem>>, vector<64x128xbf16>
    %cst_5 = arith.constant dense<0.000000e+00> : vector<46x128xf32>
    %11 = tpu.matmul %5, %10, %cst_5 {dimension_numbers = #tpu.dot_dimension_numbers<[1], [0], [0], [1], [0, 0, 1, 1], [], []>} : vector<46x64xbf16>, vector<64x128xbf16>, vector<46x128xf32> -> vector<46x128xf32>
    %12 = arith.addf %9, %11 : vector<46x128xf32>
    %c0_6 = arith.constant 0 : index
    %c0_7 = arith.constant 0 : index
    %13 = vector.load %arg5[%c0_6, %c0_7] : memref<64x128xbf16, #tpu.memory_space<vmem>>, vector<64x128xbf16>
    %cst_8 = arith.constant dense<0.000000e+00> : vector<46x128xf32>
    %14 = tpu.matmul %7, %13, %cst_8 {dimension_numbers = #tpu.dot_dimension_numbers<[1], [0], [0], [1], [0, 0, 1, 1], [], []>} : vector<46x64xbf16>, vector<64x128xbf16>, vector<46x128xf32> -> vector<46x128xf32>
    %15 = arith.addf %12, %14 : vector<46x128xf32>
    %c0_9 = arith.constant 0 : index
    %c0_10 = arith.constant 0 : index
    %16 = vector.load %arg2[%c0_9, %c0_10] : memref<48x1xf32, #tpu.memory_space<vmem>>, vector<46x1xf32>
    %17 = vector.broadcast %16 : vector<46x1xf32> to vector<46x128xf32>
    %18 = arith.mulf %15, %17 : vector<46x128xf32>
    %19 = arith.truncf %18 : vector<46x128xf32> to vector<46x128xbf16>
    %c0_11 = arith.constant 0 : index
    %c0_12 = arith.constant 0 : index
    %20 = vector.load %arg6[%c0_11, %c0_12] : memref<48x128xbf16, #tpu.memory_space<vmem>>, vector<46x128xbf16>
    tpu.vector_store %arg6[%c0_11, %c0_12], %19 {strides = array<i32>} : memref<48x128xbf16, #tpu.memory_space<vmem>>, vector<46x128xbf16>,
    %cst_13 = arith.constant 0.000000e+00 : bf16
    %21 = vector.broadcast %cst_13 : bf16 to vector<2x128xbf16>
    %c46 = arith.constant 46 : index
    %c0_14 = arith.constant 0 : index
    %22 = vector.load %arg6[%c46, %c0_14] : memref<48x128xbf16, #tpu.memory_space<vmem>>, vector<2x128xbf16>
    tpu.vector_store %arg6[%c46, %c0_14], %21 {strides = array<i32>} : memref<48x128xbf16, #tpu.memory_space<vmem>>, vector<2x128xbf16>,
    %cst_15 = arith.constant dense<0.000000e+00> : vector<128xf32>
    %23 = vector.multi_reduction <add>, %18, %cst_15 [0] : vector<46x128xf32> to vector<128xf32>
    %24 = vector.shape_cast %23 : vector<128xf32> to vector<1x128xf32>
    %c0_16 = arith.constant 0 : index
    %c0_17 = arith.constant 0 : index
    %c0_18 = arith.constant 0 : index
    %25 = vector.load %arg7[%c0_16, %c0_17, %c0_18] : memref<1x2x128xf32, #tpu.memory_space<vmem>>, vector<1x1x128xf32>
    %26 = vector.shape_cast %25 : vector<1x1x128xf32> to vector<1x128xf32>
    %27 = vector.shape_cast %24 : vector<1x128xf32> to vector<1x1x128xf32>
    tpu.vector_store %arg7[%c0_16, %c0_17, %c0_18], %27 {strides = array<i32>} : memref<1x2x128xf32, #tpu.memory_space<vmem>>, vector<1x1x128xf32>,
    %28 = arith.mulf %18, %18 : vector<46x128xf32>
    %cst_19 = arith.constant dense<0.000000e+00> : vector<128xf32>
    %29 = vector.multi_reduction <add>, %28, %cst_19 [0] : vector<46x128xf32> to vector<128xf32>
    %30 = vector.shape_cast %29 : vector<128xf32> to vector<1x128xf32>
    %c0_20 = arith.constant 0 : index
    %c1 = arith.constant 1 : index
    %c0_21 = arith.constant 0 : index
    %31 = vector.load %arg7[%c0_20, %c1, %c0_21] : memref<1x2x128xf32, #tpu.memory_space<vmem>>, vector<1x1x128xf32>
    %32 = vector.shape_cast %31 : vector<1x1x128xf32> to vector<1x128xf32>
    %33 = vector.shape_cast %30 : vector<1x128xf32> to vector<1x1x128xf32>
    tpu.vector_store %arg7[%c0_20, %c1, %c0_21], %33 {strides = array<i32>} : memref<1x2x128xf32, #tpu.memory_space<vmem>>, vector<1x1x128xf32>,
    return
  }
  func.func @transform_0(%arg0: i32) -> (i32, i32) {
    %c0_i32 = arith.constant 0 : i32
    %c0_i32_0 = arith.constant 0 : i32
    return %arg0, %c0_i32 : i32, i32
  }
  func.func @transform_1(%arg0: i32) -> (i32, i32) {
    %c0_i32 = arith.constant 0 : i32
    %c0_i32_0 = arith.constant 0 : i32
    %c0_i32_1 = arith.constant 0 : i32
    return %c0_i32, %c0_i32_0 : i32, i32
  }
  func.func @transform_2(%arg0: i32) -> (i32, i32) {
    %c0_i32 = arith.constant 0 : i32
    %c0_i32_0 = arith.constant 0 : i32
    %c0_i32_1 = arith.constant 0 : i32
    return %c0_i32, %c0_i32_0 : i32, i32
  }
  func.func @transform_3(%arg0: i32) -> (i32, i32) {
    %c0_i32 = arith.constant 0 : i32
    %c0_i32_0 = arith.constant 0 : i32
    %c0_i32_1 = arith.constant 0 : i32
    return %c0_i32, %c0_i32_0 : i32, i32
  }
  func.func @transform_4(%arg0: i32) -> (i32, i32) {
    %c0_i32 = arith.constant 0 : i32
    %c0_i32_0 = arith.constant 0 : i32
    %c0_i32_1 = arith.constant 0 : i32
    return %c0_i32, %c0_i32_0 : i32, i32
  }
  func.func @transform_5(%arg0: i32) -> (i32, i32) {
    %c0_i32 = arith.constant 0 : i32
    %c0_i32_0 = arith.constant 0 : i32
    return %arg0, %c0_i32 : i32, i32
  }
  func.func @transform_6(%arg0: i32) -> (i32, i32, i32) {
    %c0_i32 = arith.constant 0 : i32
    %c0_i32_0 = arith.constant 0 : i32
    %c0_i32_1 = arith.constant 0 : i32
    return %arg0, %c0_i32, %c0_i32_0 : i32, i32, i32
  }
}

module attributes {stable_mosaic.version = 11 : i64} {
  func.func @_convT_kernel(%arg0: i32, %arg1: memref<48x128xbf16, #tpu.memory_space<vmem>>, %arg2: memref<48x1xf32, #tpu.memory_space<vmem>>, %arg3: memref<3x128xf32, #tpu.memory_space<vmem>>, %arg4: memref<128x128xbf16, #tpu.memory_space<vmem>>, %arg5: memref<128x128xbf16, #tpu.memory_space<vmem>>, %arg6: memref<128x128xbf16, #tpu.memory_space<vmem>>, %arg7: memref<48x128xbf16, #tpu.memory_space<vmem>>, %arg8: memref<48x128xbf16, #tpu.memory_space<vmem>>, %arg9: memref<1x2x128xf32, #tpu.memory_space<vmem>>) attributes {dimension_semantics = [#tpu.dimension_semantics<parallel>], iteration_bounds = array<i64: 1>, scalar_prefetch = 0 : i64, scratch_operands = 0 : i64, tpu.core_type = #tpu.core_type<tc>, window_params = [{transform_indices = @transform_0, window_bounds = array<i64: 48, 128>}, {pipeline_mode = #tpu.pipeline_mode<synchronous>, transform_indices = @transform_1, window_bounds = array<i64: 48, 1>}, {pipeline_mode = #tpu.pipeline_mode<synchronous>, transform_indices = @transform_2, window_bounds = array<i64: 3, 128>}, {pipeline_mode = #tpu.pipeline_mode<synchronous>, transform_indices = @transform_3, window_bounds = array<i64: 128, 128>}, {pipeline_mode = #tpu.pipeline_mode<synchronous>, transform_indices = @transform_4, window_bounds = array<i64: 128, 128>}, {pipeline_mode = #tpu.pipeline_mode<synchronous>, transform_indices = @transform_5, window_bounds = array<i64: 128, 128>}, {transform_indices = @transform_6, window_bounds = array<i64: 48, 128>}, {transform_indices = @transform_7, window_bounds = array<i64: 48, 128>}, {transform_indices = @transform_8, window_bounds = array<i64: 1, 2, 128>}]} {
    %c0 = arith.constant 0 : index
    %c0_0 = arith.constant 0 : index
    %0 = vector.load %arg3[%c0, %c0_0] : memref<3x128xf32, #tpu.memory_space<vmem>>, vector<1x128xf32>
    %c1 = arith.constant 1 : index
    %c0_1 = arith.constant 0 : index
    %1 = vector.load %arg3[%c1, %c0_1] : memref<3x128xf32, #tpu.memory_space<vmem>>, vector<1x128xf32>
    %c2 = arith.constant 2 : index
    %c0_2 = arith.constant 0 : index
    %2 = vector.load %arg3[%c2, %c0_2] : memref<3x128xf32, #tpu.memory_space<vmem>>, vector<1x128xf32>
    %c0_3 = arith.constant 0 : index
    %c0_4 = arith.constant 0 : index
    %3 = vector.load %arg1[%c0_3, %c0_4] : memref<48x128xbf16, #tpu.memory_space<vmem>>, vector<48x128xbf16>
    %4 = arith.extf %3 : vector<48x128xbf16> to vector<48x128xf32>
    %5 = vector.broadcast %0 : vector<1x128xf32> to vector<48x128xf32>
    %6 = arith.mulf %4, %5 : vector<48x128xf32>
    %7 = vector.broadcast %1 : vector<1x128xf32> to vector<48x128xf32>
    %8 = arith.addf %6, %7 : vector<48x128xf32>
    %cst = arith.constant 0.000000e+00 : f32
    %9 = vector.broadcast %cst : f32 to vector<48x128xf32>
    %10 = arith.cmpf oge, %8, %9 : vector<48x128xf32>
    %11 = vector.broadcast %2 : vector<1x128xf32> to vector<48x128xf32>
    %12 = arith.mulf %11, %8 : vector<48x128xf32>
    %13 = arith.select %10, %8, %12 : vector<48x128xi1>, vector<48x128xf32>
    %c0_5 = arith.constant 0 : index
    %c0_6 = arith.constant 0 : index
    %14 = vector.load %arg2[%c0_5, %c0_6] : memref<48x1xf32, #tpu.memory_space<vmem>>, vector<48x1xf32>
    %15 = vector.broadcast %14 : vector<48x1xf32> to vector<48x128xf32>
    %16 = arith.mulf %13, %15 : vector<48x128xf32>
    %17 = arith.truncf %16 : vector<48x128xf32> to vector<48x128xbf16>
    %18 = vector.extract_strided_slice %16 {offsets = [0, 0], sizes = [47, 128], strides = [1, 1]} : vector<48x128xf32> to vector<47x128xf32>
    %19 = arith.truncf %18 : vector<47x128xf32> to vector<47x128xbf16>
    %20 = vector.extract_strided_slice %16 {offsets = [1, 0], sizes = [47, 128], strides = [1, 1]} : vector<48x128xf32> to vector<47x128xf32>
    %21 = arith.truncf %20 : vector<47x128xf32> to vector<47x128xbf16>
    %c0_7 = arith.constant 0 : index
    %c0_8 = arith.constant 0 : index
    %22 = vector.load %arg4[%c0_7, %c0_8] : memref<128x128xbf16, #tpu.memory_space<vmem>>, vector<128x128xbf16>
    %cst_9 = arith.constant dense<0.000000e+00> : vector<48x128xf32>
    %23 = tpu.matmul %17, %22, %cst_9 {dimension_numbers = #tpu.dot_dimension_numbers<[1], [0], [0], [1], [0, 0, 1, 1], [], []>} : vector<48x128xbf16>, vector<128x128xbf16>, vector<48x128xf32> -> vector<48x128xf32>
    %c0_10 = arith.constant 0 : index
    %c0_11 = arith.constant 0 : index
    %24 = vector.load %arg5[%c0_10, %c0_11] : memref<128x128xbf16, #tpu.memory_space<vmem>>, vector<128x128xbf16>
    %cst_12 = arith.constant dense<0.000000e+00> : vector<47x128xf32>
    %25 = tpu.matmul %19, %24, %cst_12 {dimension_numbers = #tpu.dot_dimension_numbers<[1], [0], [0], [1], [0, 0, 1, 1], [], []>} : vector<47x128xbf16>, vector<128x128xbf16>, vector<47x128xf32> -> vector<47x128xf32>
    %c0_13 = arith.constant 0 : index
    %c0_14 = arith.constant 0 : index
    %26 = vector.load %arg6[%c0_13, %c0_14] : memref<128x128xbf16, #tpu.memory_space<vmem>>, vector<128x128xbf16>
    %cst_15 = arith.constant dense<0.000000e+00> : vector<47x128xf32>
    %27 = tpu.matmul %21, %26, %cst_15 {dimension_numbers = #tpu.dot_dimension_numbers<[1], [0], [0], [1], [0, 0, 1, 1], [], []>} : vector<47x128xbf16>, vector<128x128xbf16>, vector<47x128xf32> -> vector<47x128xf32>
    %28 = arith.addf %25, %27 : vector<47x128xf32>
    %c0_16 = arith.constant 0 : index
    %c0_17 = arith.constant 0 : index
    %29 = vector.load %arg2[%c0_16, %c0_17] : memref<48x1xf32, #tpu.memory_space<vmem>>, vector<47x1xf32>
    %30 = vector.broadcast %29 : vector<47x1xf32> to vector<47x128xf32>
    %31 = arith.mulf %28, %30 : vector<47x128xf32>
    %32 = arith.truncf %23 : vector<48x128xf32> to vector<48x128xbf16>
    %c0_18 = arith.constant 0 : index
    %c0_19 = arith.constant 0 : index
    %33 = vector.load %arg7[%c0_18, %c0_19] : memref<48x128xbf16, #tpu.memory_space<vmem>>, vector<48x128xbf16>
    tpu.vector_store %arg7[%c0_18, %c0_19], %32 {strides = array<i32>} : memref<48x128xbf16, #tpu.memory_space<vmem>>, vector<48x128xbf16>,
    %34 = vector.extract_strided_slice %31 {offsets = [0, 0], sizes = [46, 128], strides = [1, 1]} : vector<47x128xf32> to vector<46x128xf32>
    %35 = arith.truncf %34 : vector<46x128xf32> to vector<46x128xbf16>
    %c0_20 = arith.constant 0 : index
    %c0_21 = arith.constant 0 : index
    %36 = vector.load %arg8[%c0_20, %c0_21] : memref<48x128xbf16, #tpu.memory_space<vmem>>, vector<46x128xbf16>
    tpu.vector_store %arg8[%c0_20, %c0_21], %35 {strides = array<i32>} : memref<48x128xbf16, #tpu.memory_space<vmem>>, vector<46x128xbf16>,
    %cst_22 = arith.constant dense<0.000000e+00> : vector<128xf32>
    %37 = vector.multi_reduction <add>, %23, %cst_22 [0] : vector<48x128xf32> to vector<128xf32>
    %38 = vector.shape_cast %37 : vector<128xf32> to vector<1x128xf32>
    %cst_23 = arith.constant dense<0.000000e+00> : vector<128xf32>
    %39 = vector.multi_reduction <add>, %31, %cst_23 [0] : vector<47x128xf32> to vector<128xf32>
    %40 = vector.shape_cast %39 : vector<128xf32> to vector<1x128xf32>
    %41 = arith.addf %38, %40 : vector<1x128xf32>
    %c0_24 = arith.constant 0 : index
    %c0_25 = arith.constant 0 : index
    %c0_26 = arith.constant 0 : index
    %42 = vector.load %arg9[%c0_24, %c0_25, %c0_26] : memref<1x2x128xf32, #tpu.memory_space<vmem>>, vector<1x1x128xf32>
    %43 = vector.shape_cast %42 : vector<1x1x128xf32> to vector<1x128xf32>
    %44 = vector.shape_cast %41 : vector<1x128xf32> to vector<1x1x128xf32>
    tpu.vector_store %arg9[%c0_24, %c0_25, %c0_26], %44 {strides = array<i32>} : memref<1x2x128xf32, #tpu.memory_space<vmem>>, vector<1x1x128xf32>,
    %45 = arith.mulf %23, %23 : vector<48x128xf32>
    %cst_27 = arith.constant dense<0.000000e+00> : vector<128xf32>
    %46 = vector.multi_reduction <add>, %45, %cst_27 [0] : vector<48x128xf32> to vector<128xf32>
    %47 = vector.shape_cast %46 : vector<128xf32> to vector<1x128xf32>
    %48 = arith.mulf %31, %31 : vector<47x128xf32>
    %cst_28 = arith.constant dense<0.000000e+00> : vector<128xf32>
    %49 = vector.multi_reduction <add>, %48, %cst_28 [0] : vector<47x128xf32> to vector<128xf32>
    %50 = vector.shape_cast %49 : vector<128xf32> to vector<1x128xf32>
    %51 = arith.addf %47, %50 : vector<1x128xf32>
    %c0_29 = arith.constant 0 : index
    %c1_30 = arith.constant 1 : index
    %c0_31 = arith.constant 0 : index
    %52 = vector.load %arg9[%c0_29, %c1_30, %c0_31] : memref<1x2x128xf32, #tpu.memory_space<vmem>>, vector<1x1x128xf32>
    %53 = vector.shape_cast %52 : vector<1x1x128xf32> to vector<1x128xf32>
    %54 = vector.shape_cast %51 : vector<1x128xf32> to vector<1x1x128xf32>
    tpu.vector_store %arg9[%c0_29, %c1_30, %c0_31], %54 {strides = array<i32>} : memref<1x2x128xf32, #tpu.memory_space<vmem>>, vector<1x1x128xf32>,
    return
  }
  func.func @transform_0(%arg0: i32) -> (i32, i32) {
    %c0_i32 = arith.constant 0 : i32
    %c0_i32_0 = arith.constant 0 : i32
    return %arg0, %c0_i32 : i32, i32
  }
  func.func @transform_1(%arg0: i32) -> (i32, i32) {
    %c0_i32 = arith.constant 0 : i32
    %c0_i32_0 = arith.constant 0 : i32
    %c0_i32_1 = arith.constant 0 : i32
    return %c0_i32, %c0_i32_0 : i32, i32
  }
  func.func @transform_2(%arg0: i32) -> (i32, i32) {
    %c0_i32 = arith.constant 0 : i32
    %c0_i32_0 = arith.constant 0 : i32
    %c0_i32_1 = arith.constant 0 : i32
    return %c0_i32, %c0_i32_0 : i32, i32
  }
  func.func @transform_3(%arg0: i32) -> (i32, i32) {
    %c0_i32 = arith.constant 0 : i32
    %c0_i32_0 = arith.constant 0 : i32
    %c0_i32_1 = arith.constant 0 : i32
    return %c0_i32, %c0_i32_0 : i32, i32
  }
  func.func @transform_4(%arg0: i32) -> (i32, i32) {
    %c0_i32 = arith.constant 0 : i32
    %c0_i32_0 = arith.constant 0 : i32
    %c0_i32_1 = arith.constant 0 : i32
    return %c0_i32, %c0_i32_0 : i32, i32
  }
  func.func @transform_5(%arg0: i32) -> (i32, i32) {
    %c0_i32 = arith.constant 0 : i32
    %c0_i32_0 = arith.constant 0 : i32
    %c0_i32_1 = arith.constant 0 : i32
    return %c0_i32, %c0_i32_0 : i32, i32
  }
  func.func @transform_6(%arg0: i32) -> (i32, i32) {
    %c0_i32 = arith.constant 0 : i32
    %c0_i32_0 = arith.constant 0 : i32
    return %arg0, %c0_i32 : i32, i32
  }
  func.func @transform_7(%arg0: i32) -> (i32, i32) {
    %c0_i32 = arith.constant 0 : i32
    %c0_i32_0 = arith.constant 0 : i32
    return %arg0, %c0_i32 : i32, i32
  }
  func.func @transform_8(%arg0: i32) -> (i32, i32, i32) {
    %c0_i32 = arith.constant 0 : i32
    %c0_i32_0 = arith.constant 0 : i32
    %c0_i32_1 = arith.constant 0 : i32
    return %arg0, %c0_i32, %c0_i32_0 : i32, i32, i32
  }
}

</mosaic_0001>

<llo_original>
// kernel: tile.23
$region0: #{tile.23}
  #allocation0 [shape = 's32[1]{0}', space=sflag, size = 0x4, scoped, tag = 'scoped memory for tile.23']
  %s0 = inlined_call_operand.vmem [shape: f32[8], index: 0, kind: input, shape index: {}]
  %s1 = inlined_call_operand.vmem [shape: f32[16,8], index: 1, kind: output, shape index: {}]
  // Predicated region
  $region2: #{tile.23} parent=0 // pred_check
    _
  $region3: #{tile.23} parent=0 // pred_check_branch
    %3 = sbr.rel (0) target = $region5
  $region4: #{tile.23} parent=0 // pred_region
    _
  $region5: #{tile.23} parent=0 // pred_fallthru
    _
  %v4 = vld [vmem:[%s0] ss:$0 sm:$0xff]
  %5 = vst [vmem:[%s1] sm:$0xff] %v4
  %s6 = scalar_lea.vmem %s1, 8
  %7 = vst [vmem:[%s6] sm:$0xff] %v4

// kernel: tile.28
$region0: #{tile.28}
  %s0 = inlined_call_operand.vmem [shape: f32[16,8], index: 0, kind: input, shape index: {}]
  %s1 = inlined_call_operand.vmem [shape: f32[1,128], index: 1, kind: output, shape index: {}]
  $region1: #{tile.28} parent=0
    #allocation0 [shape = 'u8[4096]{0}', space=vmem, size = 0x1000, scoped, tag = 'scoped mem for output reshape']
    %v2 = vld [vmem:[%s0] sm:$0x1]
    %vm3 = vcmask 64512
    %4 = vst.msk [vmem:[#allocation0] sm:$0x1] %vm3, %v2
    %s5 = scalar_lea.vmem %s0, 15
    %v6 = vld [vmem:[%s5] sm:$0x1]
    %7 = vrot.lane.b32.xlu0 %v6, 120
    %v8 = vpop.permute.xlu0 %7
    %vm9 = vcmask 1048512
    %10 = vst.msk [vmem:[#allocation0] sm:$0x1] %vm9, %v8
    %s11 = scalar_lea.vmem %s0, 14
    %v12 = vld [vmem:[%s11] sm:$0x1]
    %13 = vrot.lane.b32.xlu0 %v12, 112
    %v14 = vpop.permute.xlu0 %13
    %vm15 = vcmask 982912
    %16 = vst.msk [vmem:[#allocation0] sm:$0x1] %vm15, %v14
    %s17 = scalar_lea.vmem %s0, 13
    %v18 = vld [vmem:[%s17] sm:$0x1]
    %19 = vrot.lane.b32.xlu0 %v18, 104
    %v20 = vpop.permute.xlu0 %19
    %vm21 = vcmask 917312
    %22 = vst.msk [vmem:[#allocation0] sm:$0x1] %vm21, %v20
    %s23 = scalar_lea.vmem %s0, 12
    %v24 = vld [vmem:[%s23] sm:$0x1]
    %25 = vrot.lane.b32.xlu0 %v24, 96
    %v26 = vpop.permute.xlu0 %25
    %vm27 = vcmask 851712
    %28 = vst.msk [vmem:[#allocation0] sm:$0x1] %vm27, %v26
    %s29 = scalar_lea.vmem %s0, 11
    %v30 = vld [vmem:[%s29] sm:$0x1]
    %31 = vrot.lane.b32.xlu0 %v30, 88
    %v32 = vpop.permute.xlu0 %31
    %vm33 = vcmask 786112
    %34 = vst.msk [vmem:[#allocation0] sm:$0x1] %vm33, %v32
    %s35 = scalar_lea.vmem %s0, 10
    %v36 = vld [vmem:[%s35] sm:$0x1]
    %37 = vrot.lane.b32.xlu0 %v36, 80
    %v38 = vpop.permute.xlu0 %37
    %vm39 = vcmask 720512
    %40 = vst.msk [vmem:[#allocation0] sm:$0x1] %vm39, %v38
    %s41 = scalar_lea.vmem %s0, 9
    %v42 = vld [vmem:[%s41] sm:$0x1]
    %43 = vrot.lane.b32.xlu0 %v42, 72
    %v44 = vpop.permute.xlu0 %43
    %vm45 = vcmask 654912
    %46 = vst.msk [vmem:[#allocation0] sm:$0x1] %vm45, %v44
    %s47 = scalar_lea.vmem %s0, 8
    %v48 = vld [vmem:[%s47] sm:$0x1]
    %49 = vrot.lane.b32.xlu0 %v48, 64
    %v50 = vpop.permute.xlu0 %49
    %vm51 = vcmask 589312
    %52 = vst.msk [vmem:[#allocation0] sm:$0x1] %vm51, %v50
    %s53 = scalar_lea.vmem %s0, 7
    %v54 = vld [vmem:[%s53] sm:$0x1]
    %55 = vrot.lane.b32.xlu0 %v54, 56
    %v56 = vpop.permute.xlu0 %55
    %vm57 = vcmask 523712
    %58 = vst.msk [vmem:[#allocation0] sm:$0x1] %vm57, %v56
    %s59 = scalar_lea.vmem %s0, 6
    %v60 = vld [vmem:[%s59] sm:$0x1]
    %61 = vrot.lane.b32.xlu0 %v60, 48
    %v62 = vpop.permute.xlu0 %61
    %vm63 = vcmask 458112
    %64 = vst.msk [vmem:[#allocation0] sm:$0x1] %vm63, %v62
    %s65 = scalar_lea.vmem %s0, 5
    %v66 = vld [vmem:[%s65] sm:$0x1]
    %67 = vrot.lane.b32.xlu0 %v66, 40
    %v68 = vpop.permute.xlu0 %67
    %vm69 = vcmask 392512
    %70 = vst.msk [vmem:[#allocation0] sm:$0x1] %vm69, %v68
    %s71 = scalar_lea.vmem %s0, 4
    %v72 = vld [vmem:[%s71] sm:$0x1]
    %73 = vrot.lane.b32.xlu0 %v72, 32
    %v74 = vpop.permute.xlu0 %73
    %vm75 = vcmask 326912
    %76 = vst.msk [vmem:[#allocation0] sm:$0x1] %vm75, %v74
    %s77 = scalar_lea.vmem %s0, 3
    %v78 = vld [vmem:[%s77] sm:$0x1]
    %79 = vrot.lane.b32.xlu0 %v78, 24
    %v80 = vpop.permute.xlu0 %79
    %vm81 = vcmask 261312
    %82 = vst.msk [vmem:[#allocation0] sm:$0x1] %vm81, %v80
    %s83 = scalar_lea.vmem %s0, 2
    %v84 = vld [vmem:[%s83] sm:$0x1]
    %85 = vrot.lane.b32.xlu0 %v84, 16
    %v86 = vpop.permute.xlu0 %85
    %vm87 = vcmask 195712
    %88 = vst.msk [vmem:[#allocation0] sm:$0x1] %vm87, %v86
    %s89 = scalar_lea.vmem %s0, 1
    %v90 = vld [vmem:[%s89] sm:$0x1]
    %91 = vrot.lane.b32.xlu0 %v90, 8
    %v92 = vpop.permute.xlu0 %91
    %vm93 = vcmask 130112
    %94 = vst.msk [vmem:[#allocation0] sm:$0x1] %vm93, %v92
    %s96 = sshllo.u32 0, 1
    %v98 = vld [vmem:[#allocation0] sm:%s96]
    %s99 = sshllo.u32 0, 1
    %100 = vst [vmem:[%s1] sm:%s99] %v98

// kernel: decoder_up_block.2
$region0: #{decoder_up_block.2}
  #allocation0 [shape = 'u32[]', space=smem, size = 0x4, offset = 0x4, fixed_abs, tag = 'smem constant byte address 0x4 - core index']
  #allocation1 [shape = 'u32[144,128]{1,0:T(1,128)}', space=vmem, size = 0x12000, scoped, tag = 'internal scratch']
  %s0 = inlined_call_operand.vmem [shape: bf16[48,64], index: 0, kind: input, shape index: {}]
  %s1 = inlined_call_operand.vmem [shape: f32[48,1], index: 1, kind: input, shape index: {}]
  %s2 = inlined_call_operand.vmem [shape: bf16[64,128], index: 2, kind: input, shape index: {}]
  %s3 = inlined_call_operand.vmem [shape: bf16[64,128], index: 3, kind: input, shape index: {}]
  %s4 = inlined_call_operand.vmem [shape: bf16[64,128], index: 4, kind: input, shape index: {}]
  %s5 = inlined_call_operand.vmem [shape: bf16[48,128], index: 5, kind: output, shape index: {0}]
  %s6 = inlined_call_operand.vmem [shape: f32[1,2,128], index: 6, kind: output, shape index: {1}]
  %7 = xla_tuple %s5, %s6
  %s8 = sld [smem:[#allocation0]]
  $region38: #{decoder_up_block.2} parent=0
    _
  %s10 = ssub.s32 1, %s8
  %s11 = scalar_select 0, %s10, %s8
  // Predicated region
  $region2: #{decoder_up_block.2} parent=0 // pred_check
    _
  $region3: #{decoder_up_block.2} parent=0 // pred_check_branch
    %13 = sbr.rel (0) target = $region5
  $region4: #{decoder_up_block.2} parent=0 // pred_region
    _
  $region5: #{decoder_up_block.2} parent=0 // pred_fallthru
    _
  // Predicated region
  $region6: #{decoder_up_block.2} parent=0 // pred_check
    _
  $region7: #{decoder_up_block.2} parent=0 // pred_check_branch
    %15 = sbr.rel (0) target = $region9
  $region8: #{decoder_up_block.2} parent=0 // pred_region
    _
  $region9: #{decoder_up_block.2} parent=0 // pred_fallthru
    _
  // Predicated region
  $region10: #{decoder_up_block.2} parent=0 // pred_check
    _
  $region11: #{decoder_up_block.2} parent=0 // pred_check_branch
    %17 = sbr.rel (0) target = $region13
  $region12: #{decoder_up_block.2} parent=0 // pred_region
    _
  $region13: #{decoder_up_block.2} parent=0 // pred_fallthru
    _
  // Predicated region
  $region14: #{decoder_up_block.2} parent=0 // pred_check
    _
  $region15: #{decoder_up_block.2} parent=0 // pred_check_branch
    %19 = sbr.rel (0) target = $region17
  $region16: #{decoder_up_block.2} parent=0 // pred_region
    _
  $region17: #{decoder_up_block.2} parent=0 // pred_fallthru
    _
  // Predicated region
  $region18: #{decoder_up_block.2} parent=0 // pred_check
    _
  $region19: #{decoder_up_block.2} parent=0 // pred_check_branch
    %21 = sbr.rel (0) target = $region21
  $region20: #{decoder_up_block.2} parent=0 // pred_region
    _
  $region21: #{decoder_up_block.2} parent=0 // pred_fallthru
    _
  %v23 = vld [vmem:[%s0] sm:$0xf]
  %v24 = vld [vmem:[%s0 + $0x4] sm:$0xf]
  %v25 = vld [vmem:[%s0 + $0x8] sm:$0xf]
  %v26 = vld [vmem:[%s0 + $0xc] sm:$0xf]
  %v27 = vld [vmem:[%s0 + $0x10] sm:$0xf]
  %v28 = vld [vmem:[%s0 + $0x14] sm:$0xf]
  %v29 = vunpack.c.l.bf16 %v23
  %v30 = vunpack.c.l.bf16 %v24
  %v31 = vunpack.c.l.bf16 %v25
  %v32 = vunpack.c.l.bf16 %v26
  %v33 = vunpack.c.l.bf16 %v27
  %v34 = vunpack.c.l.bf16 %v28
  %v35 = vpack.c.bf16 %v30, %v29
  %v36 = vpack.c.bf16 %v32, %v31
  %v37 = vpack.c.bf16 %v34, %v33
  %v38 = vld [vmem:[%s2] sm:$0xf]
  %v39 = vld [vmem:[%s2 + $0x4] sm:$0xf]
  %v40 = vld [vmem:[%s2 + $0x8] sm:$0xf]
  %v41 = vld [vmem:[%s2 + $0xc] sm:$0xf]
  %v42 = vld [vmem:[%s2 + $0x10] sm:$0xf]
  %v43 = vld [vmem:[%s2 + $0x14] sm:$0xf]
  %v44 = vld [vmem:[%s2 + $0x18] sm:$0xf]
  %v45 = vld [vmem:[%s2 + $0x1c] sm:$0xf]
  %v46 = vld [vmem:[%s3] sm:$0xf]
  %v47 = vld [vmem:[%s3 + $0x4] sm:$0xf]
  %v48 = vld [vmem:[%s3 + $0x8] sm:$0xf]
  %v49 = vld [vmem:[%s3 + $0xc] sm:$0xf]
  %v50 = vld [vmem:[%s3 + $0x10] sm:$0xf]
  %v51 = vld [vmem:[%s3 + $0x14] sm:$0xf]
  %v52 = vld [vmem:[%s3 + $0x18] sm:$0xf]
  %v53 = vld [vmem:[%s3 + $0x1c] sm:$0xf]
  %vm54 = vsmask.f32 7424
  %v56 = vshrl.u32 %v35, 16
  %v58 = vshll.u32 %v35, 16
  %v60 = vrot.slane %v58, 1
  %v61 = vor.u32 %v56, %v60
  %v63 = vshll.u32 %v36, 16
  %v65 = vrot.slane %v63, 1
  %v66 = vsel %vm54, %v61, %v65
  %v67 = vshrl.u32 %v36, 16
  %v69 = vor.u32 %v67, %v65
  %v71 = vshll.u32 %v37, 16
  %v73 = vrot.slane %v71, 1
  %v74 = vsel %vm54, %v69, %v73
  %v75 = vshrl.u32 %v37, 16
  %v77 = vor.u32 %v75, %v73
  %v86 = vunpack.c.l.b16 %v46
  %v87 = vunpack.c.l.b16 %v47
  %v88 = vunpack.c.l.b16 %v48
  %v89 = vunpack.c.l.b16 %v49
  %v90 = vunpack.c.l.b16 %v50
  %v91 = vunpack.c.l.b16 %v51
  %v92 = vunpack.c.l.b16 %v52
  %v93 = vunpack.c.l.b16 %v53
  %v94 = vpack.c.b16 %v87, %v86
  %v95 = vpack.c.b16 %v89, %v88
  %v96 = vpack.c.b16 %v91, %v90
  %v97 = vpack.c.b16 %v93, %v92
  %vm102 = vcmask 523264
  %v104 = vsel %vm102, %v66, 0
  %v107 = vsel %vm102, %v74, 0
  %v110 = vsel %vm102, %v77, 0
  %112 = vmatprep.subr.bf16.mxu0 0
  %113 = vmatpush1.bf16.msra.mxu0 %v94
  %114 = vmatprep.subr.bf16.mxu0 0
  %115 = vmatpush1.bf16.msra.mxu0 %v95
  %116 = vmatprep.subr.bf16.mxu0 0
  %117 = vmatpush1.bf16.msra.mxu0 %v96
  %118 = vmatprep.subr.bf16.mxu0 0
  %119 = vmatpush1.bf16.msra.mxu0 %v97
  %120 = vmatprep.subr.bf16.mxu0 0
  %121 = vmatpush1.bf16.msra.mxu0 0
  %122 = vmatprep.subr.bf16.mxu0 0
  %123 = vmatpush1.bf16.msra.mxu0 0
  %124 = vmatprep.subr.bf16.mxu0 0
  %125 = vmatpush1.bf16.msra.mxu0 0
  %126 = vmatprep.subr.bf16.mxu0 0
  %127 = vmatpush1.bf16.msra.mxu0 0
  %128 = vmatprep.subr.bf16.mxu0 0
  %129 = vmatpush1.bf16.msra.mxu0 0
  %130 = vmatprep.subr.bf16.mxu0 0
  %131 = vmatpush1.bf16.msra.mxu0 0
  %132 = vmatprep.subr.bf16.mxu0 0
  %133 = vmatpush1.bf16.msra.mxu0 0
  %134 = vmatprep.subr.bf16.mxu0 0
  %135 = vmatpush1.bf16.msra.mxu0 0
  %136 = vmatprep.subr.bf16.mxu0 0
  %137 = vmatpush1.bf16.msra.mxu0 0
  %138 = vmatprep.subr.bf16.mxu0 0
  %139 = vmatpush1.bf16.msra.mxu0 0
  %140 = vmatprep.subr.bf16.mxu0 0
  %141 = vmatpush1.bf16.msra.mxu0 0
  %142 = vmatprep.subr.bf16.mxu0 0
  %143 = vmatpush1.bf16.msra.mxu0 0
  %144 = vmatprep.mubr.bf16.mxu0 0
  %145 = vmatmul.mubr.bf16.gmra.mrb[0].mxu0 %v104
  %v146 = vpop.f32.mrb[0].mxu0
  %v147 = vadd.f32 0.0, %v146
  %v148 = vpop.f32.mrb[0].mxu0
  %v149 = vpop.f32.mrb[0].mxu0
  %v150 = vadd.f32 0.0, %v149
  %v151 = vpop.f32.mrb[0].mxu0
  %152 = vmatprep.mubr.bf16.mxu0 0
  %153 = vmatmul.mubr.bf16.gmra.mrb[0].mxu0 %v107
  %v154 = vpop.f32.mrb[0].mxu0
  %v155 = vadd.f32 0.0, %v154
  %v156 = vpop.f32.mrb[0].mxu0
  %v157 = vpop.f32.mrb[0].mxu0
  %v158 = vadd.f32 0.0, %v157
  %v159 = vpop.f32.mrb[0].mxu0
  %160 = vmatprep.mubr.bf16.mxu0 0
  %161 = vmatmul.mubr.bf16.gmra.mrb[0].mxu0 %v110
  %v162 = vpop.f32.mrb[0].mxu0
  %v163 = vadd.f32 0.0, %v162
  %v164 = vpop.f32.mrb[0].mxu0
  %v165 = vpop.f32.mrb[0].mxu0
  %v166 = vadd.f32 0.0, %v165
  %v167 = vpop.f32.mrb[0].mxu0
  %168 = vdwg.mxu0
  %v177 = vunpack.c.l.b16 %v38
  %v178 = vunpack.c.l.b16 %v39
  %v179 = vunpack.c.l.b16 %v40
  %v180 = vunpack.c.l.b16 %v41
  %v181 = vunpack.c.l.b16 %v42
  %v182 = vunpack.c.l.b16 %v43
  %v183 = vunpack.c.l.b16 %v44
  %v184 = vunpack.c.l.b16 %v45
  %v185 = vpack.c.b16 %v178, %v177
  %v186 = vpack.c.b16 %v180, %v179
  %v187 = vpack.c.b16 %v182, %v181
  %v188 = vpack.c.b16 %v184, %v183
  %v193 = vsel %vm102, %v35, 0
  %v195 = vsel %vm102, %v36, 0
  %v197 = vsel %vm102, %v37, 0
  %199 = vmatprep.subr.bf16.mxu0 0
  %200 = vmatpush1.bf16.msra.mxu0 %v185
  %201 = vmatprep.subr.bf16.mxu0 0
  %202 = vmatpush1.bf16.msra.mxu0 %v186
  %203 = vmatprep.subr.bf16.mxu0 0
  %204 = vmatpush1.bf16.msra.mxu0 %v187
  %205 = vmatprep.subr.bf16.mxu0 0
  %206 = vmatpush1.bf16.msra.mxu0 %v188
  %207 = vmatprep.subr.bf16.mxu0 0
  %208 = vmatpush1.bf16.msra.mxu0 0
  %209 = vmatprep.subr.bf16.mxu0 0
  %210 = vmatpush1.bf16.msra.mxu0 0
  %211 = vmatprep.subr.bf16.mxu0 0
  %212 = vmatpush1.bf16.msra.mxu0 0
  %213 = vmatprep.subr.bf16.mxu0 0
  %214 = vmatpush1.bf16.msra.mxu0 0
  %215 = vmatprep.subr.bf16.mxu0 0
  %216 = vmatpush1.bf16.msra.mxu0 0
  %217 = vmatprep.subr.bf16.mxu0 0
  %218 = vmatpush1.bf16.msra.mxu0 0
  %219 = vmatprep.subr.bf16.mxu0 0
  %220 = vmatpush1.bf16.msra.mxu0 0
  %221 = vmatprep.subr.bf16.mxu0 0
  %222 = vmatpush1.bf16.msra.mxu0 0
  %223 = vmatprep.subr.bf16.mxu0 0
  %224 = vmatpush1.bf16.msra.mxu0 0
  %225 = vmatprep.subr.bf16.mxu0 0
  %226 = vmatpush1.bf16.msra.mxu0 0
  %227 = vmatprep.subr.bf16.mxu0 0
  %228 = vmatpush1.bf16.msra.mxu0 0
  %229 = vmatprep.subr.bf16.mxu0 0
  %230 = vmatpush1.bf16.msra.mxu0 0
  %231 = vmatprep.mubr.bf16.mxu0 0
  %232 = vmatmul.mubr.bf16.gmra.mrb[0].mxu0 %v193
  %v233 = vpop.f32.mrb[0].mxu0
  %v234 = vadd.f32 %v147, %v233
  %v235 = vpop.f32.mrb[0].mxu0
  %v236 = vpop.f32.mrb[0].mxu0
  %v237 = vadd.f32 %v150, %v236
  %v238 = vpop.f32.mrb[0].mxu0
  %239 = vmatprep.mubr.bf16.mxu0 0
  %240 = vmatmul.mubr.bf16.gmra.mrb[0].mxu0 %v195
  %v241 = vpop.f32.mrb[0].mxu0
  %v242 = vadd.f32 %v155, %v241
  %v243 = vpop.f32.mrb[0].mxu0
  %v244 = vpop.f32.mrb[0].mxu0
  %v245 = vadd.f32 %v158, %v244
  %v246 = vpop.f32.mrb[0].mxu0
  %247 = vmatprep.mubr.bf16.mxu0 0
  %248 = vmatmul.mubr.bf16.gmra.mrb[0].mxu0 %v197
  %v249 = vpop.f32.mrb[0].mxu0
  %v250 = vadd.f32 %v163, %v249
  %v251 = vpop.f32.mrb[0].mxu0
  %v252 = vpop.f32.mrb[0].mxu0
  %v253 = vadd.f32 %v166, %v252
  %v254 = vpop.f32.mrb[0].mxu0
  %255 = vdwg.mxu0
  %v256 = vld [vmem:[%s4] sm:$0xf]
  %v257 = vld [vmem:[%s4 + $0x4] sm:$0xf]
  %v258 = vld [vmem:[%s4 + $0x8] sm:$0xf]
  %v259 = vld [vmem:[%s4 + $0xc] sm:$0xf]
  %v260 = vld [vmem:[%s4 + $0x10] sm:$0xf]
  %v261 = vld [vmem:[%s4 + $0x14] sm:$0xf]
  %v262 = vld [vmem:[%s4 + $0x18] sm:$0xf]
  %v263 = vld [vmem:[%s4 + $0x1c] sm:$0xf]
  %vm267 = vcmask 1046528
  %v268 = vrot.slane %v35, 1
  %v269 = vrot.slane %v36, 1
  %v270 = vsel %vm267, %v268, %v269
  %v271 = vrot.slane %v37, 1
  %v272 = vsel %vm267, %v269, %v271
  %v281 = vunpack.c.l.b16 %v256
  %v282 = vunpack.c.l.b16 %v257
  %v283 = vunpack.c.l.b16 %v258
  %v284 = vunpack.c.l.b16 %v259
  %v285 = vunpack.c.l.b16 %v260
  %v286 = vunpack.c.l.b16 %v261
  %v287 = vunpack.c.l.b16 %v262
  %v288 = vunpack.c.l.b16 %v263
  %v289 = vpack.c.b16 %v282, %v281
  %v290 = vpack.c.b16 %v284, %v283
  %v291 = vpack.c.b16 %v286, %v285
  %v292 = vpack.c.b16 %v288, %v287
  %v298 = vsel %vm102, %v270, 0
  %v301 = vsel %vm102, %v272, 0
  %v304 = vsel %vm102, %v271, 0
  %306 = vmatprep.subr.bf16.mxu0 0
  %307 = vmatpush1.bf16.msra.mxu0 %v289
  %308 = vmatprep.subr.bf16.mxu0 0
  %309 = vmatpush1.bf16.msra.mxu0 %v290
  %310 = vmatprep.subr.bf16.mxu0 0
  %311 = vmatpush1.bf16.msra.mxu0 %v291
  %312 = vmatprep.subr.bf16.mxu0 0
  %313 = vmatpush1.bf16.msra.mxu0 %v292
  %314 = vmatprep.subr.bf16.mxu0 0
  %315 = vmatpush1.bf16.msra.mxu0 0
  %316 = vmatprep.subr.bf16.mxu0 0
  %317 = vmatpush1.bf16.msra.mxu0 0
  %318 = vmatprep.subr.bf16.mxu0 0
  %319 = vmatpush1.bf16.msra.mxu0 0
  %320 = vmatprep.subr.bf16.mxu0 0
  %321 = vmatpush1.bf16.msra.mxu0 0
  %322 = vmatprep.subr.bf16.mxu0 0
  %323 = vmatpush1.bf16.msra.mxu0 0
  %324 = vmatprep.subr.bf16.mxu0 0
  %325 = vmatpush1.bf16.msra.mxu0 0
  %326 = vmatprep.subr.bf16.mxu0 0
  %327 = vmatpush1.bf16.msra.mxu0 0
  %328 = vmatprep.subr.bf16.mxu0 0
  %329 = vmatpush1.bf16.msra.mxu0 0
  %330 = vmatprep.subr.bf16.mxu0 0
  %331 = vmatpush1.bf16.msra.mxu0 0
  %332 = vmatprep.subr.bf16.mxu0 0
  %333 = vmatpush1.bf16.msra.mxu0 0
  %334 = vmatprep.subr.bf16.mxu0 0
  %335 = vmatpush1.bf16.msra.mxu0 0
  %336 = vmatprep.subr.bf16.mxu0 0
  %337 = vmatpush1.bf16.msra.mxu0 0
  %338 = vmatprep.mubr.bf16.mxu0 0
  %339 = vmatmul.mubr.bf16.gmra.mrb[0].mxu0 %v298
  %v340 = vpop.f32.mrb[0].mxu0
  %v341 = vadd.f32 0.0, %v340
  %v342 = vpop.f32.mrb[0].mxu0
  %v343 = vpop.f32.mrb[0].mxu0
  %v344 = vadd.f32 0.0, %v343
  %v345 = vpop.f32.mrb[0].mxu0
  %346 = vmatprep.mubr.bf16.mxu0 0
  %347 = vmatmul.mubr.bf16.gmra.mrb[0].mxu0 %v301
  %v348 = vpop.f32.mrb[0].mxu0
  %v349 = vadd.f32 0.0, %v348
  %v350 = vpop.f32.mrb[0].mxu0
  %v351 = vpop.f32.mrb[0].mxu0
  %v352 = vadd.f32 0.0, %v351
  %v353 = vpop.f32.mrb[0].mxu0
  %354 = vmatprep.mubr.bf16.mxu0 0
  %355 = vmatmul.mubr.bf16.gmra.mrb[0].mxu0 %v304
  %v356 = vpop.f32.mrb[0].mxu0
  %v357 = vadd.f32 0.0, %v356
  %v358 = vpop.f32.mrb[0].mxu0
  %v359 = vpop.f32.mrb[0].mxu0
  %v360 = vadd.f32 0.0, %v359
  %v361 = vpop.f32.mrb[0].mxu0
  %362 = vdwg.mxu0
  %v363 = vadd.f32 %v234, %v341
  %v364 = vadd.f32 %v237, %v344
  %v365 = vadd.f32 %v242, %v349
  %v366 = vadd.f32 %v245, %v352
  %v367 = vadd.f32 %v250, %v357
  %v368 = vadd.f32 %v253, %v360
  %v369 = vld [vmem:[%s1] sm:$0xff]
  %v370 = vld [vmem:[%s1 + $0x8] sm:$0xff]
  %v371 = vld [vmem:[%s1 + $0x10] sm:$0xff]
  %v372 = vld [vmem:[%s1 + $0x18] sm:$0xff]
  %v373 = vld [vmem:[%s1 + $0x20] sm:$0xff]
  %v374 = vld [vmem:[%s1 + $0x28] sm:$0x3f]
  %376 = vset.pattern.permute.xlu0 0
  %377 = vperm.xlu0 %376, %v369
  %v378 = vpop.permute.xlu0 %377
  %381 = vset.pattern.permute.xlu0 0
  %382 = vperm.xlu0 %381, %v370
  %v383 = vpop.permute.xlu0 %382
  %386 = vset.pattern.permute.xlu0 0
  %387 = vperm.xlu0 %386, %v371
  %v388 = vpop.permute.xlu0 %387
  %391 = vset.pattern.permute.xlu0 0
  %392 = vperm.xlu0 %391, %v372
  %v393 = vpop.permute.xlu0 %392
  %396 = vset.pattern.permute.xlu0 0
  %397 = vperm.xlu0 %396, %v373
  %v398 = vpop.permute.xlu0 %397
  %401 = vset.pattern.permute.xlu0 0
  %402 = vperm.xlu0 %401, %v374
  %v403 = vpop.permute.xlu0 %402
  %v405 = vmul.f32 %v363, %v378
  %v406 = vmul.f32 %v364, %v383
  %v407 = vmul.f32 %v365, %v388
  %v408 = vmul.f32 %v366, %v393
  %v409 = vmul.f32 %v367, %v398
  %v410 = vmul.f32 %v368, %v403
  %v411 = vpack.c.bf16 %v406, %v405
  %v412 = vpack.c.bf16 %v408, %v407
  %v413 = vpack.c.bf16 %v410, %v409
  %v417 = vunpack.c.l.b16 %v411
  %v418 = vunpack.c.h.b16 %v411
  %v419 = vunpack.c.l.b16 %v412
  %v420 = vunpack.c.h.b16 %v412
  %v421 = vunpack.c.l.b16 %v413
  %v422 = vunpack.c.h.b16 %v413
  %v423 = vpack.c.b16 %v417, %v417
  %v424 = vpack.c.b16 %v418, %v418
  %v425 = vpack.c.b16 %v419, %v419
  %v426 = vpack.c.b16 %v420, %v420
  %v427 = vpack.c.b16 %v421, %v421
  %v428 = vpack.c.b16 %v422, %v422
  %435 = vst [vmem:[%s5] sm:$0xf] %v423
  %436 = vst [vmem:[%s5 + $0x4] sm:$0xf] %v424
  %437 = vst [vmem:[%s5 + $0x8] sm:$0xf] %v425
  %438 = vst [vmem:[%s5 + $0xc] sm:$0xf] %v426
  %439 = vst [vmem:[%s5 + $0x10] sm:$0xf] %v427
  %440 = vst [vmem:[%s5 + $0x14] sm:$0x7] %v428
  %441 = vst [vmem:[%s5 + $0x14] sm:$0x8] 0
  %v442 = vadd.f32 %v405, %v406
  %v443 = vadd.f32 %v442, %v407
  %v444 = vadd.f32 %v443, %v408
  %v445 = vadd.f32 %v444, %v409
  %vm446 = vcmask 1045504
  %v447 = vsel %vm446, %v410, 0.0
  %v448 = vadd.f32 %v445, %v447
  %v449 = vrot.slane %v448, 4
  %v450 = vadd.f32 %v448, %v449
  %v451 = vrot.slane %v450, 2
  %v452 = vadd.f32 %v450, %v451
  %v453 = vrot.slane %v452, 1
  %v454 = vadd.f32 %v452, %v453
  %455 = vst [vmem:[%s6] sm:$0x1] %v454
  %v456 = vmul.f32 %v405, %v405
  %v457 = vmul.f32 %v406, %v406
  %v458 = vmul.f32 %v407, %v407
  %v459 = vmul.f32 %v408, %v408
  %v460 = vmul.f32 %v409, %v409
  %v461 = vmul.f32 %v410, %v410
  %v462 = vadd.f32 %v456, %v457
  %v463 = vadd.f32 %v462, %v458
  %v464 = vadd.f32 %v463, %v459
  %v465 = vadd.f32 %v464, %v460
  %v466 = vsel %vm446, %v461, 0.0
  %v467 = vadd.f32 %v465, %v466
  %v468 = vrot.slane %v467, 4
  %v469 = vadd.f32 %v467, %v468
  %v470 = vrot.slane %v469, 2
  %v471 = vadd.f32 %v469, %v470
  %v472 = vrot.slane %v471, 1
  %v473 = vadd.f32 %v471, %v472
  %474 = vst [vmem:[%s6 + $0x1] sm:$0x1] %v473
  // Predicated region
  $region22: #{decoder_up_block.2} parent=0 // pred_check
    _
  $region23: #{decoder_up_block.2} parent=0 // pred_check_branch
    %476 = sbr.rel (0) target = $region25
  $region24: #{decoder_up_block.2} parent=0 // pred_region
    _
  $region25: #{decoder_up_block.2} parent=0 // pred_fallthru
    _
  // Predicated region
  $region26: #{decoder_up_block.2} parent=0 // pred_check
    _
  $region27: #{decoder_up_block.2} parent=0 // pred_check_branch
    %478 = sbr.rel (0) target = $region29
  $region28: #{decoder_up_block.2} parent=0 // pred_region
    _
  $region29: #{decoder_up_block.2} parent=0 // pred_fallthru
    _
  // Predicated region
  $region30: #{decoder_up_block.2} parent=0 // pred_check
    _
  $region31: #{decoder_up_block.2} parent=0 // pred_check_branch
    %480 = sbr.rel (0) target = $region33
  $region32: #{decoder_up_block.2} parent=0 // pred_region
    _
  $region33: #{decoder_up_block.2} parent=0 // pred_fallthru
    _
  // Predicated region
  $region34: #{decoder_up_block.2} parent=0 // pred_check
    _
  $region35: #{decoder_up_block.2} parent=0 // pred_check_branch
    %482 = sbr.rel (0) target = $region37
  $region36: #{decoder_up_block.2} parent=0 // pred_region
    _
  $region37: #{decoder_up_block.2} parent=0 // pred_fallthru
    _

// kernel: tile.38
$region0: #{tile.38}
  #allocation0 [shape = 's32[1]{0}', space=sflag, size = 0x4, scoped, tag = 'scoped memory for tile.38']
  %s0 = inlined_call_operand.vmem [shape: f32[4], index: 0, kind: input, shape index: {}]
  %s1 = inlined_call_operand.vmem [shape: f32[32,4], index: 1, kind: output, shape index: {}]
  // Predicated region
  $region2: #{tile.38} parent=0 // pred_check
    _
  $region3: #{tile.38} parent=0 // pred_check_branch
    %3 = sbr.rel (0) target = $region5
  $region4: #{tile.38} parent=0 // pred_region
    _
  $region5: #{tile.38} parent=0 // pred_fallthru
    _
  %v4 = vld [vmem:[%s0] ss:$0 sm:$0xff]
  %5 = vst [vmem:[%s1] sm:$0xff] %v4
  %s6 = scalar_lea.vmem %s1, 8
  %7 = vst [vmem:[%s6] sm:$0xff] %v4
  %s8 = scalar_lea.vmem %s1, 16
  %9 = vst [vmem:[%s8] sm:$0xff] %v4
  %s10 = scalar_lea.vmem %s1, 24
  %11 = vst [vmem:[%s10] sm:$0xff] %v4

// kernel: decoder_up_block.3
$region0: #{decoder_up_block.3}
  #allocation0 [shape = 'u32[]', space=smem, size = 0x4, offset = 0x4, fixed_abs, tag = 'smem constant byte address 0x4 - core index']
  #allocation1 [shape = 'u32[144,128]{1,0:T(1,128)}', space=vmem, size = 0x12000, scoped, tag = 'internal scratch']
  %s0 = inlined_call_operand.vmem [shape: bf16[48,128], index: 0, kind: input, shape index: {}]
  %s1 = inlined_call_operand.vmem [shape: f32[48,1], index: 1, kind: input, shape index: {}]
  %s2 = inlined_call_operand.vmem [shape: f32[3,128], index: 2, kind: input, shape index: {}]
  %s3 = inlined_call_operand.vmem [shape: bf16[128,128], index: 3, kind: input, shape index: {}]
  %s4 = inlined_call_operand.vmem [shape: bf16[128,128], index: 4, kind: input, shape index: {}]
  %s5 = inlined_call_operand.vmem [shape: bf16[128,128], index: 5, kind: input, shape index: {}]
  %s6 = inlined_call_operand.vmem [shape: bf16[48,128], index: 6, kind: output, shape index: {0}]
  %s7 = inlined_call_operand.vmem [shape: bf16[48,128], index: 7, kind: output, shape index: {1}]
  %s8 = inlined_call_operand.vmem [shape: f32[1,2,128], index: 8, kind: output, shape index: {2}]
  %9 = xla_tuple %s6, %s7, %s8
  %s10 = sld [smem:[#allocation0]]
  $region50: #{decoder_up_block.3} parent=0
    _
  %s12 = ssub.s32 1, %s10
  %s13 = scalar_select 0, %s12, %s10
  // Predicated region
  $region2: #{decoder_up_block.3} parent=0 // pred_check
    _
  $region3: #{decoder_up_block.3} parent=0 // pred_check_branch
    %15 = sbr.rel (0) target = $region5
  $region4: #{decoder_up_block.3} parent=0 // pred_region
    _
  $region5: #{decoder_up_block.3} parent=0 // pred_fallthru
    _
  // Predicated region
  $region6: #{decoder_up_block.3} parent=0 // pred_check
    _
  $region7: #{decoder_up_block.3} parent=0 // pred_check_branch
    %17 = sbr.rel (0) target = $region9
  $region8: #{decoder_up_block.3} parent=0 // pred_region
    _
  $region9: #{decoder_up_block.3} parent=0 // pred_fallthru
    _
  // Predicated region
  $region10: #{decoder_up_block.3} parent=0 // pred_check
    _
  $region11: #{decoder_up_block.3} parent=0 // pred_check_branch
    %19 = sbr.rel (0) target = $region13
  $region12: #{decoder_up_block.3} parent=0 // pred_region
    _
  $region13: #{decoder_up_block.3} parent=0 // pred_fallthru
    _
  // Predicated region
  $region14: #{decoder_up_block.3} parent=0 // pred_check
    _
  $region15: #{decoder_up_block.3} parent=0 // pred_check_branch
    %21 = sbr.rel (0) target = $region17
  $region16: #{decoder_up_block.3} parent=0 // pred_region
    _
  $region17: #{decoder_up_block.3} parent=0 // pred_fallthru
    _
  // Predicated region
  $region18: #{decoder_up_block.3} parent=0 // pred_check
    _
  $region19: #{decoder_up_block.3} parent=0 // pred_check_branch
    %23 = sbr.rel (0) target = $region21
  $region20: #{decoder_up_block.3} parent=0 // pred_region
    _
  $region21: #{decoder_up_block.3} parent=0 // pred_fallthru
    _
  // Predicated region
  $region22: #{decoder_up_block.3} parent=0 // pred_check
    _
  $region23: #{decoder_up_block.3} parent=0 // pred_check_branch
    %25 = sbr.rel (0) target = $region25
  $region24: #{decoder_up_block.3} parent=0 // pred_region
    _
  $region25: #{decoder_up_block.3} parent=0 // pred_fallthru
    _
  %v27 = vld [vmem:[%s2] sm:$0x1]
  %v28 = vld [vmem:[%s2 + $0x1] sm:$0x1]
  %v29 = vld [vmem:[%s2 + $0x2] sm:$0x1]
  %v30 = vld [vmem:[%s0] sm:$0xf]
  %v31 = vld [vmem:[%s0 + $0x4] sm:$0xf]
  %v32 = vld [vmem:[%s0 + $0x8] sm:$0xf]
  %v33 = vld [vmem:[%s0 + $0xc] sm:$0xf]
  %v34 = vld [vmem:[%s0 + $0x10] sm:$0xf]
  %v35 = vld [vmem:[%s0 + $0x14] sm:$0xf]
  %v36 = vunpack.c.l.bf16 %v30
  %v37 = vunpack.c.l.bf16 %v31
  %v38 = vunpack.c.l.bf16 %v32
  %v39 = vunpack.c.l.bf16 %v33
  %v40 = vunpack.c.l.bf16 %v34
  %v41 = vunpack.c.l.bf16 %v35
  %v42 = vlaneseq
  %v43 = vshrl.u32 %v42, 7
  %v44 = vsub.s32 0, %v43
  %v45 = vrot.slane %v27, %v44
  %v46 = vmul.f32 %v36, %v45
  %v47 = vmul.f32 %v37, %v45
  %v48 = vmul.f32 %v38, %v45
  %v49 = vmul.f32 %v39, %v45
  %v50 = vmul.f32 %v40, %v45
  %v51 = vmul.f32 %v41, %v45
  %v52 = vlaneseq
  %v53 = vshrl.u32 %v52, 7
  %v54 = vsub.s32 0, %v53
  %v55 = vrot.slane %v28, %v54
  %v56 = vadd.f32 %v46, %v55
  %v57 = vadd.f32 %v47, %v55
  %v58 = vadd.f32 %v48, %v55
  %v59 = vadd.f32 %v49, %v55
  %v60 = vadd.f32 %v50, %v55
  %v61 = vadd.f32 %v51, %v55
  %vm62 = vcmp.ge.f32.partialorder %v56, 0.0
  %vm63 = vcmp.ge.f32.partialorder %v57, 0.0
  %vm64 = vcmp.ge.f32.partialorder %v58, 0.0
  %vm65 = vcmp.ge.f32.partialorder %v59, 0.0
  %vm66 = vcmp.ge.f32.partialorder %v60, 0.0
  %vm67 = vcmp.ge.f32.partialorder %v61, 0.0
  %v68 = vlaneseq
  %v69 = vshrl.u32 %v68, 7
  %v70 = vsub.s32 0, %v69
  %v71 = vrot.slane %v29, %v70
  %v72 = vmul.f32 %v71, %v56
  %v73 = vmul.f32 %v71, %v57
  %v74 = vmul.f32 %v71, %v58
  %v75 = vmul.f32 %v71, %v59
  %v76 = vmul.f32 %v71, %v60
  %v77 = vmul.f32 %v71, %v61
  %v78 = vsel %vm62, %v56, %v72
  %v79 = vsel %vm63, %v57, %v73
  %v80 = vsel %vm64, %v58, %v74
  %v81 = vsel %vm65, %v59, %v75
  %v82 = vsel %vm66, %v60, %v76
  %v83 = vsel %vm67, %v61, %v77
  %v84 = vld [vmem:[%s1] sm:$0xff]
  %v85 = vld [vmem:[%s1 + $0x8] sm:$0xff]
  %v86 = vld [vmem:[%s1 + $0x10] sm:$0xff]
  %v87 = vld [vmem:[%s1 + $0x18] sm:$0xff]
  %v88 = vld [vmem:[%s1 + $0x20] sm:$0xff]
  %v89 = vld [vmem:[%s1 + $0x28] sm:$0xff]
  %91 = vset.pattern.permute.xlu0 0
  %92 = vperm.xlu0 %91, %v84
  %v93 = vpop.permute.xlu0 %92
  %96 = vset.pattern.permute.xlu0 0
  %97 = vperm.xlu0 %96, %v85
  %v98 = vpop.permute.xlu0 %97
  %101 = vset.pattern.permute.xlu0 0
  %102 = vperm.xlu0 %101, %v86
  %v103 = vpop.permute.xlu0 %102
  %106 = vset.pattern.permute.xlu0 0
  %107 = vperm.xlu0 %106, %v87
  %v108 = vpop.permute.xlu0 %107
  %111 = vset.pattern.permute.xlu0 0
  %112 = vperm.xlu0 %111, %v88
  %v113 = vpop.permute.xlu0 %112
  %116 = vset.pattern.permute.xlu0 0
  %117 = vperm.xlu0 %116, %v89
  %v118 = vpop.permute.xlu0 %117
  %v120 = vmul.f32 %v78, %v93
  %v121 = vmul.f32 %v79, %v98
  %v122 = vmul.f32 %v80, %v103
  %v123 = vmul.f32 %v81, %v108
  %v124 = vmul.f32 %v82, %v113
  %v125 = vmul.f32 %v83, %v118
  %v126 = vpack.c.bf16 %v121, %v120
  %v127 = vpack.c.bf16 %v123, %v122
  %v128 = vpack.c.bf16 %v125, %v124
  %v129 = vld [vmem:[%s3] sm:$0xf]
  %v130 = vld [vmem:[%s3 + $0x4] sm:$0xf]
  %v131 = vld [vmem:[%s3 + $0x8] sm:$0xf]
  %v132 = vld [vmem:[%s3 + $0xc] sm:$0xf]
  %v133 = vld [vmem:[%s3 + $0x10] sm:$0xf]
  %v134 = vld [vmem:[%s3 + $0x14] sm:$0xf]
  %v135 = vld [vmem:[%s3 + $0x18] sm:$0xf]
  %v136 = vld [vmem:[%s3 + $0x1c] sm:$0xf]
  %v137 = vld [vmem:[%s3 + $0x20] sm:$0xf]
  %v138 = vld [vmem:[%s3 + $0x24] sm:$0xf]
  %v139 = vld [vmem:[%s3 + $0x28] sm:$0xf]
  %v140 = vld [vmem:[%s3 + $0x2c] sm:$0xf]
  %v141 = vld [vmem:[%s3 + $0x30] sm:$0xf]
  %v142 = vld [vmem:[%s3 + $0x34] sm:$0xf]
  %v143 = vld [vmem:[%s3 + $0x38] sm:$0xf]
  %v144 = vld [vmem:[%s3 + $0x3c] sm:$0xf]
  %v161 = vunpack.c.l.b16 %v129
  %v162 = vunpack.c.l.b16 %v130
  %v163 = vunpack.c.l.b16 %v131
  %v164 = vunpack.c.l.b16 %v132
  %v165 = vunpack.c.l.b16 %v133
  %v166 = vunpack.c.l.b16 %v134
  %v167 = vunpack.c.l.b16 %v135
  %v168 = vunpack.c.l.b16 %v136
  %v169 = vunpack.c.l.b16 %v137
  %v170 = vunpack.c.l.b16 %v138
  %v171 = vunpack.c.l.b16 %v139
  %v172 = vunpack.c.l.b16 %v140
  %v173 = vunpack.c.l.b16 %v141
  %v174 = vunpack.c.l.b16 %v142
  %v175 = vunpack.c.l.b16 %v143
  %v176 = vunpack.c.l.b16 %v144
  %v177 = vpack.c.b16 %v162, %v161
  %v178 = vpack.c.b16 %v164, %v163
  %v179 = vpack.c.b16 %v166, %v165
  %v180 = vpack.c.b16 %v168, %v167
  %v181 = vpack.c.b16 %v170, %v169
  %v182 = vpack.c.b16 %v172, %v171
  %v183 = vpack.c.b16 %v174, %v173
  %v184 = vpack.c.b16 %v176, %v175
  %193 = vmatprep.subr.bf16.mxu0 0
  %194 = vmatpush1.bf16.msra.mxu0 %v177
  %195 = vmatprep.subr.bf16.mxu0 0
  %196 = vmatpush1.bf16.msra.mxu0 %v178
  %197 = vmatprep.subr.bf16.mxu0 0
  %198 = vmatpush1.bf16.msra.mxu0 %v179
  %199 = vmatprep.subr.bf16.mxu0 0
  %200 = vmatpush1.bf16.msra.mxu0 %v180
  %201 = vmatprep.subr.bf16.mxu0 0
  %202 = vmatpush1.bf16.msra.mxu0 %v181
  %203 = vmatprep.subr.bf16.mxu0 0
  %204 = vmatpush1.bf16.msra.mxu0 %v182
  %205 = vmatprep.subr.bf16.mxu0 0
  %206 = vmatpush1.bf16.msra.mxu0 %v183
  %207 = vmatprep.subr.bf16.mxu0 0
  %208 = vmatpush1.bf16.msra.mxu0 %v184
  %209 = vmatprep.subr.bf16.mxu0 0
  %210 = vmatpush1.bf16.msra.mxu0 0
  %211 = vmatprep.subr.bf16.mxu0 0
  %212 = vmatpush1.bf16.msra.mxu0 0
  %213 = vmatprep.subr.bf16.mxu0 0
  %214 = vmatpush1.bf16.msra.mxu0 0
  %215 = vmatprep.subr.bf16.mxu0 0
  %216 = vmatpush1.bf16.msra.mxu0 0
  %217 = vmatprep.subr.bf16.mxu0 0
  %218 = vmatpush1.bf16.msra.mxu0 0
  %219 = vmatprep.subr.bf16.mxu0 0
  %220 = vmatpush1.bf16.msra.mxu0 0
  %221 = vmatprep.subr.bf16.mxu0 0
  %222 = vmatpush1.bf16.msra.mxu0 0
  %223 = vmatprep.subr.bf16.mxu0 0
  %224 = vmatpush1.bf16.msra.mxu0 0
  %225 = vmatprep.mubr.bf16.mxu0 0
  %226 = vmatmul.mubr.bf16.gmra.mrb[0].mxu0 %v126
  %v227 = vpop.f32.mrb[0].mxu0
  %v228 = vadd.f32 0.0, %v227
  %v229 = vpop.f32.mrb[0].mxu0
  %v230 = vpop.f32.mrb[0].mxu0
  %v231 = vadd.f32 0.0, %v230
  %v232 = vpop.f32.mrb[0].mxu0
  %233 = vmatprep.mubr.bf16.mxu0 0
  %234 = vmatmul.mubr.bf16.gmra.mrb[0].mxu0 %v127
  %v235 = vpop.f32.mrb[0].mxu0
  %v236 = vadd.f32 0.0, %v235
  %v237 = vpop.f32.mrb[0].mxu0
  %v238 = vpop.f32.mrb[0].mxu0
  %v239 = vadd.f32 0.0, %v238
  %v240 = vpop.f32.mrb[0].mxu0
  %241 = vmatprep.mubr.bf16.mxu0 0
  %242 = vmatmul.mubr.bf16.gmra.mrb[0].mxu0 %v128
  %v243 = vpop.f32.mrb[0].mxu0
  %v244 = vadd.f32 0.0, %v243
  %v245 = vpop.f32.mrb[0].mxu0
  %v246 = vpop.f32.mrb[0].mxu0
  %v247 = vadd.f32 0.0, %v246
  %v248 = vpop.f32.mrb[0].mxu0
  %249 = vdwg.mxu0
  %v250 = vld [vmem:[%s4] sm:$0xf]
  %v251 = vld [vmem:[%s4 + $0x4] sm:$0xf]
  %v252 = vld [vmem:[%s4 + $0x8] sm:$0xf]
  %v253 = vld [vmem:[%s4 + $0xc] sm:$0xf]
  %v254 = vld [vmem:[%s4 + $0x10] sm:$0xf]
  %v255 = vld [vmem:[%s4 + $0x14] sm:$0xf]
  %v256 = vld [vmem:[%s4 + $0x18] sm:$0xf]
  %v257 = vld [vmem:[%s4 + $0x1c] sm:$0xf]
  %v258 = vld [vmem:[%s4 + $0x20] sm:$0xf]
  %v259 = vld [vmem:[%s4 + $0x24] sm:$0xf]
  %v260 = vld [vmem:[%s4 + $0x28] sm:$0xf]
  %v261 = vld [vmem:[%s4 + $0x2c] sm:$0xf]
  %v262 = vld [vmem:[%s4 + $0x30] sm:$0xf]
  %v263 = vld [vmem:[%s4 + $0x34] sm:$0xf]
  %v264 = vld [vmem:[%s4 + $0x38] sm:$0xf]
  %v265 = vld [vmem:[%s4 + $0x3c] sm:$0xf]
  %v266 = vld [vmem:[%s5] sm:$0xf]
  %v267 = vld [vmem:[%s5 + $0x4] sm:$0xf]
  %v268 = vld [vmem:[%s5 + $0x8] sm:$0xf]
  %v269 = vld [vmem:[%s5 + $0xc] sm:$0xf]
  %v270 = vld [vmem:[%s5 + $0x10] sm:$0xf]
  %v271 = vld [vmem:[%s5 + $0x14] sm:$0xf]
  %v272 = vld [vmem:[%s5 + $0x18] sm:$0xf]
  %v273 = vld [vmem:[%s5 + $0x1c] sm:$0xf]
  %v274 = vld [vmem:[%s5 + $0x20] sm:$0xf]
  %v275 = vld [vmem:[%s5 + $0x24] sm:$0xf]
  %v276 = vld [vmem:[%s5 + $0x28] sm:$0xf]
  %v277 = vld [vmem:[%s5 + $0x2c] sm:$0xf]
  %v278 = vld [vmem:[%s5 + $0x30] sm:$0xf]
  %v279 = vld [vmem:[%s5 + $0x34] sm:$0xf]
  %v280 = vld [vmem:[%s5 + $0x38] sm:$0xf]
  %v281 = vld [vmem:[%s5 + $0x3c] sm:$0xf]
  %vm282 = vsmask.f32 7424
  %v284 = vshrl.u32 %v126, 16
  %v286 = vshll.u32 %v126, 16
  %v288 = vrot.slane %v286, 1
  %v289 = vor.u32 %v284, %v288
  %v291 = vshll.u32 %v127, 16
  %v293 = vrot.slane %v291, 1
  %v294 = vsel %vm282, %v289, %v293
  %v295 = vshrl.u32 %v127, 16
  %v297 = vor.u32 %v295, %v293
  %v299 = vshll.u32 %v128, 16
  %v301 = vrot.slane %v299, 1
  %v302 = vsel %vm282, %v297, %v301
  %v303 = vshrl.u32 %v128, 16
  %v305 = vor.u32 %v303, %v301
  %v325 = vunpack.c.l.b16 %v266
  %v326 = vunpack.c.l.b16 %v267
  %v327 = vunpack.c.l.b16 %v268
  %v328 = vunpack.c.l.b16 %v269
  %v329 = vunpack.c.l.b16 %v270
  %v330 = vunpack.c.l.b16 %v271
  %v331 = vunpack.c.l.b16 %v272
  %v332 = vunpack.c.l.b16 %v273
  %v333 = vunpack.c.l.b16 %v274
  %v334 = vunpack.c.l.b16 %v275
  %v335 = vunpack.c.l.b16 %v276
  %v336 = vunpack.c.l.b16 %v277
  %v337 = vunpack.c.l.b16 %v278
  %v338 = vunpack.c.l.b16 %v279
  %v339 = vunpack.c.l.b16 %v280
  %v340 = vunpack.c.l.b16 %v281
  %v341 = vpack.c.b16 %v326, %v325
  %v342 = vpack.c.b16 %v328, %v327
  %v343 = vpack.c.b16 %v330, %v329
  %v344 = vpack.c.b16 %v332, %v331
  %v345 = vpack.c.b16 %v334, %v333
  %v346 = vpack.c.b16 %v336, %v335
  %v347 = vpack.c.b16 %v338, %v337
  %v348 = vpack.c.b16 %v340, %v339
  %357 = vmatprep.subr.bf16.mxu0 0
  %358 = vmatpush1.bf16.msra.mxu0 %v341
  %359 = vmatprep.subr.bf16.mxu0 0
  %360 = vmatpush1.bf16.msra.mxu0 %v342
  %361 = vmatprep.subr.bf16.mxu0 0
  %362 = vmatpush1.bf16.msra.mxu0 %v343
  %363 = vmatprep.subr.bf16.mxu0 0
  %364 = vmatpush1.bf16.msra.mxu0 %v344
  %365 = vmatprep.subr.bf16.mxu0 0
  %366 = vmatpush1.bf16.msra.mxu0 %v345
  %367 = vmatprep.subr.bf16.mxu0 0
  %368 = vmatpush1.bf16.msra.mxu0 %v346
  %369 = vmatprep.subr.bf16.mxu0 0
  %370 = vmatpush1.bf16.msra.mxu0 %v347
  %371 = vmatprep.subr.bf16.mxu0 0
  %372 = vmatpush1.bf16.msra.mxu0 %v348
  %373 = vmatprep.subr.bf16.mxu0 0
  %374 = vmatpush1.bf16.msra.mxu0 0
  %375 = vmatprep.subr.bf16.mxu0 0
  %376 = vmatpush1.bf16.msra.mxu0 0
  %377 = vmatprep.subr.bf16.mxu0 0
  %378 = vmatpush1.bf16.msra.mxu0 0
  %379 = vmatprep.subr.bf16.mxu0 0
  %380 = vmatpush1.bf16.msra.mxu0 0
  %381 = vmatprep.subr.bf16.mxu0 0
  %382 = vmatpush1.bf16.msra.mxu0 0
  %383 = vmatprep.subr.bf16.mxu0 0
  %384 = vmatpush1.bf16.msra.mxu0 0
  %385 = vmatprep.subr.bf16.mxu0 0
  %386 = vmatpush1.bf16.msra.mxu0 0
  %387 = vmatprep.subr.bf16.mxu0 0
  %388 = vmatpush1.bf16.msra.mxu0 0
  %389 = vmatprep.mubr.bf16.mxu0 0
  %390 = vmatmul.mubr.bf16.gmra.mrb[0].mxu0 %v294
  %v391 = vpop.f32.mrb[0].mxu0
  %v392 = vadd.f32 0.0, %v391
  %v393 = vpop.f32.mrb[0].mxu0
  %v394 = vpop.f32.mrb[0].mxu0
  %v395 = vadd.f32 0.0, %v394
  %v396 = vpop.f32.mrb[0].mxu0
  %397 = vmatprep.mubr.bf16.mxu0 0
  %398 = vmatmul.mubr.bf16.gmra.mrb[0].mxu0 %v302
  %v399 = vpop.f32.mrb[0].mxu0
  %v400 = vadd.f32 0.0, %v399
  %v401 = vpop.f32.mrb[0].mxu0
  %v402 = vpop.f32.mrb[0].mxu0
  %v403 = vadd.f32 0.0, %v402
  %v404 = vpop.f32.mrb[0].mxu0
  %405 = vmatprep.mubr.bf16.mxu0 0
  %406 = vmatmul.mubr.bf16.gmra.mrb[0].mxu0 %v305
  %v407 = vpop.f32.mrb[0].mxu0
  %v408 = vadd.f32 0.0, %v407
  %v409 = vpop.f32.mrb[0].mxu0
  %v410 = vpop.f32.mrb[0].mxu0
  %v411 = vadd.f32 0.0, %v410
  %v412 = vpop.f32.mrb[0].mxu0
  %413 = vdwg.mxu0
  %v430 = vunpack.c.l.b16 %v250
  %v431 = vunpack.c.l.b16 %v251
  %v432 = vunpack.c.l.b16 %v252
  %v433 = vunpack.c.l.b16 %v253
  %v434 = vunpack.c.l.b16 %v254
  %v435 = vunpack.c.l.b16 %v255
  %v436 = vunpack.c.l.b16 %v256
  %v437 = vunpack.c.l.b16 %v257
  %v438 = vunpack.c.l.b16 %v258
  %v439 = vunpack.c.l.b16 %v259
  %v440 = vunpack.c.l.b16 %v260
  %v441 = vunpack.c.l.b16 %v261
  %v442 = vunpack.c.l.b16 %v262
  %v443 = vunpack.c.l.b16 %v263
  %v444 = vunpack.c.l.b16 %v264
  %v445 = vunpack.c.l.b16 %v265
  %v446 = vpack.c.b16 %v431, %v430
  %v447 = vpack.c.b16 %v433, %v432
  %v448 = vpack.c.b16 %v435, %v434
  %v449 = vpack.c.b16 %v437, %v436
  %v450 = vpack.c.b16 %v439, %v438
  %v451 = vpack.c.b16 %v441, %v440
  %v452 = vpack.c.b16 %v443, %v442
  %v453 = vpack.c.b16 %v445, %v444
  %462 = vmatprep.subr.bf16.mxu0 0
  %463 = vmatpush1.bf16.msra.mxu0 %v446
  %464 = vmatprep.subr.bf16.mxu0 0
  %465 = vmatpush1.bf16.msra.mxu0 %v447
  %466 = vmatprep.subr.bf16.mxu0 0
  %467 = vmatpush1.bf16.msra.mxu0 %v448
  %468 = vmatprep.subr.bf16.mxu0 0
  %469 = vmatpush1.bf16.msra.mxu0 %v449
  %470 = vmatprep.subr.bf16.mxu0 0
  %471 = vmatpush1.bf16.msra.mxu0 %v450
  %472 = vmatprep.subr.bf16.mxu0 0
  %473 = vmatpush1.bf16.msra.mxu0 %v451
  %474 = vmatprep.subr.bf16.mxu0 0
  %475 = vmatpush1.bf16.msra.mxu0 %v452
  %476 = vmatprep.subr.bf16.mxu0 0
  %477 = vmatpush1.bf16.msra.mxu0 %v453
  %478 = vmatprep.subr.bf16.mxu0 0
  %479 = vmatpush1.bf16.msra.mxu0 0
  %480 = vmatprep.subr.bf16.mxu0 0
  %481 = vmatpush1.bf16.msra.mxu0 0
  %482 = vmatprep.subr.bf16.mxu0 0
  %483 = vmatpush1.bf16.msra.mxu0 0
  %484 = vmatprep.subr.bf16.mxu0 0
  %485 = vmatpush1.bf16.msra.mxu0 0
  %486 = vmatprep.subr.bf16.mxu0 0
  %487 = vmatpush1.bf16.msra.mxu0 0
  %488 = vmatprep.subr.bf16.mxu0 0
  %489 = vmatpush1.bf16.msra.mxu0 0
  %490 = vmatprep.subr.bf16.mxu0 0
  %491 = vmatpush1.bf16.msra.mxu0 0
  %492 = vmatprep.subr.bf16.mxu0 0
  %493 = vmatpush1.bf16.msra.mxu0 0
  %494 = vmatprep.mubr.bf16.mxu0 0
  %495 = vmatmul.mubr.bf16.gmra.mrb[0].mxu0 %v126
  %v496 = vpop.f32.mrb[0].mxu0
  %v497 = vadd.f32 %v392, %v496
  %v498 = vpop.f32.mrb[0].mxu0
  %v499 = vpop.f32.mrb[0].mxu0
  %v500 = vadd.f32 %v395, %v499
  %v501 = vpop.f32.mrb[0].mxu0
  %502 = vmatprep.mubr.bf16.mxu0 0
  %503 = vmatmul.mubr.bf16.gmra.mrb[0].mxu0 %v127
  %v504 = vpop.f32.mrb[0].mxu0
  %v505 = vadd.f32 %v400, %v504
  %v506 = vpop.f32.mrb[0].mxu0
  %v507 = vpop.f32.mrb[0].mxu0
  %v508 = vadd.f32 %v403, %v507
  %v509 = vpop.f32.mrb[0].mxu0
  %510 = vmatprep.mubr.bf16.mxu0 0
  %511 = vmatmul.mubr.bf16.gmra.mrb[0].mxu0 %v128
  %v512 = vpop.f32.mrb[0].mxu0
  %v513 = vadd.f32 %v408, %v512
  %v514 = vpop.f32.mrb[0].mxu0
  %v515 = vpop.f32.mrb[0].mxu0
  %v516 = vadd.f32 %v411, %v515
  %v517 = vpop.f32.mrb[0].mxu0
  %518 = vdwg.mxu0
  %v519 = vld [vmem:[%s1] sm:$0xff]
  %v520 = vld [vmem:[%s1 + $0x8] sm:$0xff]
  %v521 = vld [vmem:[%s1 + $0x10] sm:$0xff]
  %v522 = vld [vmem:[%s1 + $0x18] sm:$0xff]
  %v523 = vld [vmem:[%s1 + $0x20] sm:$0xff]
  %v524 = vld [vmem:[%s1 + $0x28] sm:$0x7f]
  %526 = vset.pattern.permute.xlu0 0
  %527 = vperm.xlu0 %526, %v519
  %v528 = vpop.permute.xlu0 %527
  %531 = vset.pattern.permute.xlu0 0
  %532 = vperm.xlu0 %531, %v520
  %v533 = vpop.permute.xlu0 %532
  %536 = vset.pattern.permute.xlu0 0
  %537 = vperm.xlu0 %536, %v521
  %v538 = vpop.permute.xlu0 %537
  %541 = vset.pattern.permute.xlu0 0
  %542 = vperm.xlu0 %541, %v522
  %v543 = vpop.permute.xlu0 %542
  %546 = vset.pattern.permute.xlu0 0
  %547 = vperm.xlu0 %546, %v523
  %v548 = vpop.permute.xlu0 %547
  %551 = vset.pattern.permute.xlu0 0
  %552 = vperm.xlu0 %551, %v524
  %v553 = vpop.permute.xlu0 %552
  %v555 = vmul.f32 %v497, %v528
  %v556 = vmul.f32 %v500, %v533
  %v557 = vmul.f32 %v505, %v538
  %v558 = vmul.f32 %v508, %v543
  %v559 = vmul.f32 %v513, %v548
  %v560 = vmul.f32 %v516, %v553
  %v561 = vpack.c.bf16 %v231, %v228
  %v562 = vpack.c.bf16 %v239, %v236
  %v563 = vpack.c.bf16 %v247, %v244
  %v567 = vunpack.c.l.b16 %v561
  %v568 = vunpack.c.h.b16 %v561
  %v569 = vunpack.c.l.b16 %v562
  %v570 = vunpack.c.h.b16 %v562
  %v571 = vunpack.c.l.b16 %v563
  %v572 = vunpack.c.h.b16 %v563
  %v573 = vpack.c.b16 %v567, %v567
  %v574 = vpack.c.b16 %v568, %v568
  %v575 = vpack.c.b16 %v569, %v569
  %v576 = vpack.c.b16 %v570, %v570
  %v577 = vpack.c.b16 %v571, %v571
  %v578 = vpack.c.b16 %v572, %v572
  %585 = vst [vmem:[%s6] sm:$0xf] %v573
  %586 = vst [vmem:[%s6 + $0x4] sm:$0xf] %v574
  %587 = vst [vmem:[%s6 + $0x8] sm:$0xf] %v575
  %588 = vst [vmem:[%s6 + $0xc] sm:$0xf] %v576
  %589 = vst [vmem:[%s6 + $0x10] sm:$0xf] %v577
  %590 = vst [vmem:[%s6 + $0x14] sm:$0xf] %v578
  %v591 = vpack.c.bf16 %v556, %v555
  %v592 = vpack.c.bf16 %v558, %v557
  %v593 = vpack.c.bf16 %v560, %v559
  %v597 = vunpack.c.l.b16 %v591
  %v598 = vunpack.c.h.b16 %v591
  %v599 = vunpack.c.l.b16 %v592
  %v600 = vunpack.c.h.b16 %v592
  %v601 = vunpack.c.l.b16 %v593
  %v602 = vunpack.c.h.b16 %v593
  %v603 = vpack.c.b16 %v597, %v597
  %v604 = vpack.c.b16 %v598, %v598
  %v605 = vpack.c.b16 %v599, %v599
  %v606 = vpack.c.b16 %v600, %v600
  %v607 = vpack.c.b16 %v601, %v601
  %v608 = vpack.c.b16 %v602, %v602
  %615 = vst [vmem:[%s7] sm:$0xf] %v603
  %616 = vst [vmem:[%s7 + $0x4] sm:$0xf] %v604
  %617 = vst [vmem:[%s7 + $0x8] sm:$0xf] %v605
  %618 = vst [vmem:[%s7 + $0xc] sm:$0xf] %v606
  %619 = vst [vmem:[%s7 + $0x10] sm:$0xf] %v607
  %620 = vst [vmem:[%s7 + $0x14] sm:$0x7] %v608
  %v621 = vadd.f32 %v228, %v231
  %v622 = vadd.f32 %v621, %v236
  %v623 = vadd.f32 %v622, %v239
  %v624 = vadd.f32 %v623, %v244
  %v625 = vadd.f32 %v624, %v247
  %v626 = vrot.slane %v625, 4
  %v627 = vadd.f32 %v625, %v626
  %v628 = vrot.slane %v627, 2
  %v629 = vadd.f32 %v627, %v628
  %v630 = vrot.slane %v629, 1
  %v631 = vadd.f32 %v629, %v630
  %v632 = vadd.f32 %v555, %v556
  %v633 = vadd.f32 %v632, %v557
  %v634 = vadd.f32 %v633, %v558
  %v635 = vadd.f32 %v634, %v559
  %vm636 = vcmask 1046528
  %v637 = vsel %vm636, %v560, 0.0
  %v638 = vadd.f32 %v635, %v637
  %v639 = vrot.slane %v638, 4
  %v640 = vadd.f32 %v638, %v639
  %v641 = vrot.slane %v640, 2
  %v642 = vadd.f32 %v640, %v641
  %v643 = vrot.slane %v642, 1
  %v644 = vadd.f32 %v642, %v643
  %v645 = vadd.f32 %v631, %v644
  %646 = vst [vmem:[%s8] sm:$0x1] %v645
  %v647 = vmul.f32 %v228, %v228
  %v648 = vmul.f32 %v231, %v231
  %v649 = vmul.f32 %v236, %v236
  %v650 = vmul.f32 %v239, %v239
  %v651 = vmul.f32 %v244, %v244
  %v652 = vmul.f32 %v247, %v247
  %v653 = vadd.f32 %v647, %v648
  %v654 = vadd.f32 %v653, %v649
  %v655 = vadd.f32 %v654, %v650
  %v656 = vadd.f32 %v655, %v651
  %v657 = vadd.f32 %v656, %v652
  %v658 = vrot.slane %v657, 4
  %v659 = vadd.f32 %v657, %v658
  %v660 = vrot.slane %v659, 2
  %v661 = vadd.f32 %v659, %v660
  %v662 = vrot.slane %v661, 1
  %v663 = vadd.f32 %v661, %v662
  %v664 = vmul.f32 %v555, %v555
  %v665 = vmul.f32 %v556, %v556
  %v666 = vmul.f32 %v557, %v557
  %v667 = vmul.f32 %v558, %v558
  %v668 = vmul.f32 %v559, %v559
  %v669 = vmul.f32 %v560, %v560
  %v670 = vadd.f32 %v664, %v665
  %v671 = vadd.f32 %v670, %v666
  %v672 = vadd.f32 %v671, %v667
  %v673 = vadd.f32 %v672, %v668
  %v674 = vsel %vm636, %v669, 0.0
  %v675 = vadd.f32 %v673, %v674
  %v676 = vrot.slane %v675, 4
  %v677 = vadd.f32 %v675, %v676
  %v678 = vrot.slane %v677, 2
  %v679 = vadd.f32 %v677, %v678
  %v680 = vrot.slane %v679, 1
  %v681 = vadd.f32 %v679, %v680
  %v682 = vadd.f32 %v663, %v681
  %683 = vst [vmem:[%s8 + $0x1] sm:$0x1] %v682
  // Predicated region
  $region26: #{decoder_up_block.3} parent=0 // pred_check
    _
  $region27: #{decoder_up_block.3} parent=0 // pred_check_branch
    %685 = sbr.rel (0) target = $region29
  $region28: #{decoder_up_block.3} parent=0 // pred_region
    _
  $region29: #{decoder_up_block.3} parent=0 // pred_fallthru
    _
  // Predicated region
  $region30: #{decoder_up_block.3} parent=0 // pred_check
    _
  $region31: #{decoder_up_block.3} parent=0 // pred_check_branch
    %687 = sbr.rel (0) target = $region33
  $region32: #{decoder_up_block.3} parent=0 // pred_region
    _
  $region33: #{decoder_up_block.3} parent=0 // pred_fallthru
    _
  // Predicated region
  $region34: #{decoder_up_block.3} parent=0 // pred_check
    _
  $region35: #{decoder_up_block.3} parent=0 // pred_check_branch
    %689 = sbr.rel (0) target = $region37
  $region36: #{decoder_up_block.3} parent=0 // pred_region
    _
  $region37: #{decoder_up_block.3} parent=0 // pred_fallthru
    _
  // Predicated region
  $region38: #{decoder_up_block.3} parent=0 // pred_check
    _
  $region39: #{decoder_up_block.3} parent=0 // pred_check_branch
    %691 = sbr.rel (0) target = $region41
  $region40: #{decoder_up_block.3} parent=0 // pred_region
    _
  $region41: #{decoder_up_block.3} parent=0 // pred_fallthru
    _
  // Predicated region
  $region42: #{decoder_up_block.3} parent=0 // pred_check
    _
  $region43: #{decoder_up_block.3} parent=0 // pred_check_branch
    %693 = sbr.rel (0) target = $region45
  $region44: #{decoder_up_block.3} parent=0 // pred_region
    _
  $region45: #{decoder_up_block.3} parent=0 // pred_fallthru
    _
  // Predicated region
  $region46: #{decoder_up_block.3} parent=0 // pred_check
    _
  $region47: #{decoder_up_block.3} parent=0 // pred_check_branch
    %695 = sbr.rel (0) target = $region49
  $region48: #{decoder_up_block.3} parent=0 // pred_region
    _
  $region49: #{decoder_up_block.3} parent=0 // pred_fallthru
    _

</llo_original>
